<compile_context>
chip_gen: v5e
topology: v5e:2x2
jax: 0.10.0
libtpu: 0.0.40
codegen_flags: <defaults>
</compile_context>

<pallas_src>
import functools

import jax
import jax.numpy as jnp
from jax.experimental import pallas as pl
from jax.experimental.pallas import tpu as pltpu

K = 5        # kernel_size of every GatedCausalConv1d layer
LANE = 128   # TPU lane width: channel dims are padded to a multiple of this
PAD8 = 8     # causal pad region rounded up to a full sublane group (>= K-1)


def _round_up(n, m):
    return ((n + m - 1) // m) * m


def _pad_axis(x, axis, target):
    if x.shape[axis] == target:
        return x
    cfg = [(0, 0)] * x.ndim
    cfg[axis] = (0, target - x.shape[axis])
    return jnp.pad(x, cfg)


# ----------------------------------------------------------------------------
# Fused Pallas kernel: all gated causal layers + output head
# ----------------------------------------------------------------------------
def _fused_pixelcnn_kernel(x_ref, wc_ref, bc_ref, wr_ref, br_ref,
                           w1_ref, b1_ref, w2_ref, b2_ref,
                           o_ref, act_ref, *, TB, Lp, Dp, n_layers, resident):
    """One grid step = (batch block b of TB elements, layer l).

    act_ref: VMEM scratch (TB, PAD8+Lp, Dp).  Rows [0, PAD8) of each batch
    slab are the (over-allocated, sublane-aligned) causal left zero-pad and
    stay zero; rows [PAD8, PAD8+Lp) hold the current activation, resident in
    VMEM across the whole layer loop of this batch block.
    """
    l = pl.program_id(1)
    M = TB * Lp

    # First layer for this batch block: zero ONLY the pad rows, then write the
    # embedded input into the (aligned) activation rows.
    @pl.when(l == 0)
    def _init():
        act_ref[:, pl.ds(0, PAD8), :] = jnp.zeros((TB, PAD8, Dp), jnp.float32)
        act_ref[:, pl.ds(PAD8, Lp), :] = x_ref[...].astype(jnp.float32)

    # Per-layer weight selection: resident weights are indexed by l inside the
    # kernel; streamed weights arrive as a single-layer block (index 0).
    wl = l if resident else 0
    wc_l = wc_ref.at[wl]                      # (K*Dp, 2*Dp) bf16 view

    # Current activation entering this layer (aligned read, start = 8).
    x_cur = act_ref[:, pl.ds(PAD8, Lp), :].reshape(M, Dp)          # f32

    # Causal conv as K accumulating MXU dots fed straight from the scratch
    # (bf16 operands, f32 accumulation).  Tap K-1 reuses the aligned x_cur.
    acc = jnp.dot(x_cur.astype(jnp.bfloat16),
                  wc_l[pl.ds((K - 1) * Dp, Dp), :],
                  preferred_element_type=jnp.float32)              # (M, 2*Dp)
    for k in range(K - 1):
        xk = act_ref[:, pl.ds(PAD8 - (K - 1) + k, Lp), :]
        xk = xk.reshape(M, Dp).astype(jnp.bfloat16)
        acc = acc + jnp.dot(xk, wc_l[pl.ds(k * Dp, Dp), :],
                            preferred_element_type=jnp.float32)
    acc = acc + bc_ref[wl]                                         # (1, 2*Dp)

    # Gated activation.  sigmoid(b) = 0.5*(1 + tanh(b/2)) -> fewer EUP pushes.
    a = acc[:, :Dp]
    b = acc[:, Dp:]
    gated = jnp.tanh(a) * (0.5 * (jnp.tanh(0.5 * b) + 1.0))

    # 1x1 residual conv; skip connection on every layer except layer 0
    # (select only -- no full-tile multiply on layer 0).
    out = jnp.dot(gated.astype(jnp.bfloat16), wr_ref[wl],
                  preferred_element_type=jnp.float32)
    out = out + br_ref[wl]
    out = jnp.where(l > 0, out + x_cur, out)

    act_ref[:, pl.ds(PAD8, Lp), :] = out.reshape(TB, Lp, Dp)

    # Output head fused into the epilogue of the last layer.
    @pl.when(l == n_layers - 1)
    def _head():
        h = jnp.dot(out.astype(jnp.bfloat16), w1_ref[...],
                    preferred_element_type=jnp.float32)
        h = jnp.maximum(h + b1_ref[...], 0.0)
        logits = jnp.dot(h.astype(jnp.bfloat16), w2_ref[...],
                         preferred_element_type=jnp.float32)
        logits = logits + b2_ref[...]
        o_ref[...] = logits.reshape(o_ref.shape).astype(o_ref.dtype)


# ----------------------------------------------------------------------------
# Host-side weight packing (pad channels to 128 lanes, stack layers, bf16)
# ----------------------------------------------------------------------------
def _pack_params(params, Dp, Hp, Ep):
    D = params["embedding"].shape[1]
    wc_l, bc_l, wr_l, br_l = [], [], [], []
    for layer in params["layers"]:
        wc = layer["wc"]                      # (K, D, 2D), wc[k] = W_pt[:, :, k].T
        # Split gate halves so the tanh half lands in lanes [0, Dp) and the
        # sigmoid half in lanes [Dp, 2*Dp) of the padded layout.
        wa = _pad_axis(_pad_axis(wc[..., :D], 1, Dp), 2, Dp)
        wb = _pad_axis(_pad_axis(wc[..., D:], 1, Dp), 2, Dp)
        wc_l.append(jnp.concatenate([wa, wb], axis=2).reshape(K * Dp, 2 * Dp))
        bc = layer["bc"]                      # (1, 2D)
        bc_l.append(jnp.concatenate(
            [_pad_axis(bc[:, :D], 1, Dp), _pad_axis(bc[:, D:], 1, Dp)], axis=1))
        wr_l.append(_pad_axis(_pad_axis(layer["wr"], 0, Dp), 1, Dp))
        br_l.append(_pad_axis(layer["br"], 1, Dp))
    wc_all = jnp.stack(wc_l).astype(jnp.bfloat16)   # (n_layers, K*Dp, 2*Dp)
    bc_all = jnp.stack(bc_l)                        # (n_layers, 1, 2*Dp) f32
    wr_all = jnp.stack(wr_l).astype(jnp.bfloat16)   # (n_layers, Dp, Dp)
    br_all = jnp.stack(br_l)                        # (n_layers, 1, Dp)   f32
    w1 = _pad_axis(_pad_axis(params["w1"], 0, Dp), 1, Hp).astype(jnp.bfloat16)
    b1 = _pad_axis(params["b1"], 1, Hp)             # (1, Hp) f32
    w2 = _pad_axis(_pad_axis(params["w2"], 0, Hp), 1, Ep).astype(jnp.bfloat16)
    b2 = _pad_axis(params["b2"], 1, Ep)             # (1, Ep) f32
    return wc_all, bc_all, wr_all, br_all, w1, b1, w2, b2


# ----------------------------------------------------------------------------
# Full forward (embedding gather + single fused pallas_call)
# ----------------------------------------------------------------------------
def gated_pixelcnn_forward(token_ids, params):
    emb = params["embedding"]                 # (E, D)
    E, D = emb.shape
    H = params["w1"].shape[1]
    n_layers = len(params["layers"])
    B, L = token_ids.shape
    Dp = _round_up(D, LANE)
    Ep = _round_up(E, LANE)
    Hp = _round_up(H, LANE)
    Lp = _round_up(L, 8)

    # Batch tile TB: target matmul M-dim = TB*Lp >= 256, capped by a VMEM
    # budget for the scratch + double-buffered x/out blocks and by B itself.
    per_b_bytes = ((PAD8 + Lp) * Dp + 2 * Lp * Dp + 2 * Lp * Ep) * 4
    tb_vmem_cap = max(1, (12 * 1024 * 1024) // per_b_bytes)
    TB = max(1, min(pl.cdiv(256, Lp), tb_vmem_cap, B))
    Bp = _round_up(B, TB)
    # TODO(synk): on v7x with B < 2*TB, a second parallel split (e.g. over the
    # gate halves) would be needed to occupy both TensorCores.

    # Embedding lookup is glue (gather) in plain JAX; pad batch/length/lanes.
    ids = jnp.pad(token_ids, ((0, Bp - B), (0, Lp - L)))
    x = _pad_axis(jnp.take(emb, ids, axis=0), 2, Dp).astype(jnp.float32)

    wc_all, bc_all, wr_all, br_all, w1, b1, w2, b2 = _pack_params(params, Dp, Hp, Ep)

    # Keep layer weights VMEM-resident (fetched once) if they are small; else
    # stream them per layer via layer-indexed BlockSpecs (double-buffered).
    layer_bytes = (wc_all.size + wr_all.size) * 2 + (bc_all.size + br_all.size) * 4
    resident = layer_bytes <= 6 * 1024 * 1024

    if resident:
        wc_spec = pl.BlockSpec(wc_all.shape, lambda bb, ll: (0, 0, 0))
        bc_spec = pl.BlockSpec(bc_all.shape, lambda bb, ll: (0, 0, 0))
        wr_spec = pl.BlockSpec(wr_all.shape, lambda bb, ll: (0, 0, 0))
        br_spec = pl.BlockSpec(br_all.shape, lambda bb, ll: (0, 0, 0))
    else:
        wc_spec = pl.BlockSpec((1,) + wc_all.shape[1:], lambda bb, ll: (ll, 0, 0))
        bc_spec = pl.BlockSpec((1,) + bc_all.shape[1:], lambda bb, ll: (ll, 0, 0))
        wr_spec = pl.BlockSpec((1,) + wr_all.shape[1:], lambda bb, ll: (ll, 0, 0))
        br_spec = pl.BlockSpec((1,) + br_all.shape[1:], lambda bb, ll: (ll, 0, 0))

    kern = functools.partial(_fused_pixelcnn_kernel,
                             TB=TB, Lp=Lp, Dp=Dp, n_layers=n_layers,
                             resident=resident)

    out_p = pl.pallas_call(
        kern,
        out_shape=jax.ShapeDtypeStruct((Bp, Lp, Ep), jnp.float32),
        grid=(Bp // TB, n_layers),
        in_specs=[
            pl.BlockSpec((TB, Lp, Dp), lambda bb, ll: (bb, 0, 0)),   # x (per batch block)
            wc_spec,                                                 # conv weights
            bc_spec,                                                 # conv bias
            wr_spec,                                                 # residual 1x1 weights
            br_spec,                                                 # residual 1x1 bias
            pl.BlockSpec(w1.shape, lambda bb, ll: (0, 0)),           # head w1
            pl.BlockSpec(b1.shape, lambda bb, ll: (0, 0)),           # head b1
            pl.BlockSpec(w2.shape, lambda bb, ll: (0, 0)),           # head w2
            pl.BlockSpec(b2.shape, lambda bb, ll: (0, 0)),           # head b2
        ],
        # Output index_map independent of the layer axis: writeback happens
        # once per batch block, after the head has filled the buffer.
        out_specs=pl.BlockSpec((TB, Lp, Ep), lambda bb, ll: (bb, 0, 0)),
        scratch_shapes=[pltpu.VMEM((TB, PAD8 + Lp, Dp), jnp.float32)],
        compiler_params=pltpu.CompilerParams(
            dimension_semantics=("parallel", "arbitrary"),
            vmem_limit_bytes=32 * 1024 * 1024),
    )(x, wc_all, bc_all, wr_all, br_all, w1, b1, w2, b2)

    # Slice off padding and return PyTorch NCL layout (B, embed_number, L).
    return jnp.transpose(out_p[:B, :L, :E], (0, 2, 1))


# TODO(synk): generate() is a host-side autoregressive multinomial-sampling
# loop around repeated forward calls, not a kernel; it is not implemented here.


# ----------------------------------------------------------------------------
# Deterministic parameter init + pure-JAX reference for verification
# ----------------------------------------------------------------------------
def init_params(key, embed_number, D, n_layers, hidden=256):
    keys = jax.random.split(key, 3 + 4 * n_layers + 2)
    kit = iter(keys)
    params = {
        "embedding": 0.1 * jax.random.normal(next(kit), (embed_number, D), jnp.float32),
        "layers": [],
    }
    for i in range(n_layers):
        wc = 0.1 * jax.random.normal(next(kit), (K, D, 2 * D), jnp.float32)
        if i == 0:  # mask_type == 'causal': zero the last tap (current position)
            wc = wc.at[K - 1].set(0.0)
        bc = 0.1 * jax.random.normal(next(kit), (1, 2 * D), jnp.float32)
        wr = 0.1 * jax.random.normal(next(kit), (D, D), jnp.float32)
        br = 0.1 * jax.random.normal(next(kit), (1, D), jnp.float32)
        params["layers"].append({"wc": wc, "bc": bc, "wr": wr, "br": br})
    params["w1"] = 0.1 * jax.random.normal(next(kit), (D, hidden), jnp.float32)
    params["b1"] = 0.1 * jax.random.normal(next(kit), (1, hidden), jnp.float32)
    params["w2"] = 0.1 * jax.random.normal(next(kit), (hidden, embed_number), jnp.float32)
    params["b2"] = 0.1 * jax.random.normal(next(kit), (1, embed_number), jnp.float32)
    return params


def reference_forward(token_ids, params):
    x = jnp.take(params["embedding"], token_ids, axis=0)
    B, L, D = x.shape
    for i, layer in enumerate(params["layers"]):
        xp = jnp.pad(x, ((0, 0), (K - 1, 0), (0, 0)))
        acc = jnp.zeros((B, L, 2 * D), jnp.float32) + layer["bc"]
        for k in range(K):
            acc = acc + jnp.einsum("bld,de->ble", xp[:, k:k + L, :], layer["wc"][k])
        gated = jnp.tanh(acc[..., :D]) * jax.nn.sigmoid(acc[..., D:])
        out = jnp.einsum("bld,de->ble", gated, layer["wr"]) + layer["br"]
        if i != 0:
            out = out + x
        x = out
    h = jnp.maximum(jnp.einsum("bld,dh->blh", x, params["w1"]) + params["b1"], 0.0)
    o = jnp.einsum("blh,he->ble", h, params["w2"]) + params["b2"]
    return jnp.transpose(o, (0, 2, 1))


if __name__ == "__main__":
    B, L = 2, 16
    embed_number = 16
    pixel_embed_dim = 32
    n_layers = 3

    root = jax.random.PRNGKey(0)
    k_params, k_ids = jax.random.split(root)
    params = init_params(k_params, embed_number, pixel_embed_dim, n_layers)
    token_ids = jax.random.randint(k_ids, (B, L), 0, embed_number, dtype=jnp.int32)

    out = jax.block_until_ready(gated_pixelcnn_forward(token_ids, params))
    assert out.shape == (B, embed_number, L), out.shape

    ref = jax.block_until_ready(reference_forward(token_ids, params))
    # bf16 matmul operands (f32 accumulation) -> relaxed tolerance vs f32 ref.
    max_err = float(jnp.max(jnp.abs(out - ref)))
    assert jnp.allclose(out, ref, rtol=5e-2, atol=5e-2), max_err

    print("KERNEL_OK")
</pallas_src>

<mosaic_0001>
module attributes {stable_mosaic.version = 11 : i64} {
  func.func @_fused_pixelcnn_kernel(%arg0: i32, %arg1: i32, %arg2: memref<2x16x128xf32, #tpu.memory_space<vmem>>, %arg3: memref<3x640x256xbf16, #tpu.memory_space<vmem>>, %arg4: memref<3x1x256xf32, #tpu.memory_space<vmem>>, %arg5: memref<3x128x128xbf16, #tpu.memory_space<vmem>>, %arg6: memref<3x1x128xf32, #tpu.memory_space<vmem>>, %arg7: memref<128x256xbf16, #tpu.memory_space<vmem>>, %arg8: memref<1x256xf32, #tpu.memory_space<vmem>>, %arg9: memref<256x128xbf16, #tpu.memory_space<vmem>>, %arg10: memref<1x128xf32, #tpu.memory_space<vmem>>, %arg11: memref<2x16x128xf32, #tpu.memory_space<vmem>>, %arg12: memref<2x24x128xf32, #tpu.memory_space<vmem>>) attributes {dimension_semantics = [#tpu.dimension_semantics<parallel>, #tpu.dimension_semantics<arbitrary>], iteration_bounds = array<i64: 1, 3>, scalar_prefetch = 0 : i64, scratch_operands = 1 : i64, tpu.core_type = #tpu.core_type<tc>, window_params = [{transform_indices = @transform_0, window_bounds = array<i64: 2, 16, 128>}, {pipeline_mode = #tpu.pipeline_mode<synchronous>, transform_indices = @transform_1, window_bounds = array<i64: 3, 640, 256>}, {pipeline_mode = #tpu.pipeline_mode<synchronous>, transform_indices = @transform_2, window_bounds = array<i64: 3, 1, 256>}, {pipeline_mode = #tpu.pipeline_mode<synchronous>, transform_indices = @transform_3, window_bounds = array<i64: 3, 128, 128>}, {pipeline_mode = #tpu.pipeline_mode<synchronous>, transform_indices = @transform_4, window_bounds = array<i64: 3, 1, 128>}, {pipeline_mode = #tpu.pipeline_mode<synchronous>, transform_indices = @transform_5, window_bounds = array<i64: 128, 256>}, {pipeline_mode = #tpu.pipeline_mode<synchronous>, transform_indices = @transform_6, window_bounds = array<i64: 1, 256>}, {pipeline_mode = #tpu.pipeline_mode<synchronous>, transform_indices = @transform_7, window_bounds = array<i64: 256, 128>}, {pipeline_mode = #tpu.pipeline_mode<synchronous>, transform_indices = @transform_8, window_bounds = array<i64: 1, 128>}, {transform_indices = @transform_9, window_bounds = array<i64: 2, 16, 128>}]} {
    %c0_i32 = arith.constant 0 : i32
    %0 = arith.cmpi eq, %arg1, %c0_i32 : i32
    %1 = arith.extui %0 : i1 to i32
    %c0_i32_0 = arith.constant 0 : i32
    %2 = arith.cmpi ne, %1, %c0_i32_0 : i32
    scf.if %2 {
      %cst_45 = arith.constant 0.000000e+00 : f32
      %76 = vector.broadcast %cst_45 : f32 to vector<2x8x128xf32>
      %c0_46 = arith.constant 0 : index
      %c0_47 = arith.constant 0 : index
      %c0_48 = arith.constant 0 : index
      %77 = vector.load %arg12[%c0_46, %c0_47, %c0_48] : memref<2x24x128xf32, #tpu.memory_space<vmem>>, vector<2x8x128xf32>
      tpu.vector_store %arg12[%c0_46, %c0_47, %c0_48], %76 {strides = array<i32>} : memref<2x24x128xf32, #tpu.memory_space<vmem>>, vector<2x8x128xf32>,
      %c0_49 = arith.constant 0 : index
      %c0_50 = arith.constant 0 : index
      %c0_51 = arith.constant 0 : index
      %78 = vector.load %arg2[%c0_49, %c0_50, %c0_51] : memref<2x16x128xf32, #tpu.memory_space<vmem>>, vector<2x16x128xf32>
      %c0_52 = arith.constant 0 : index
      %c8_53 = arith.constant 8 : index
      %c0_54 = arith.constant 0 : index
      %79 = vector.load %arg12[%c0_52, %c8_53, %c0_54] : memref<2x24x128xf32, #tpu.memory_space<vmem>>, vector<2x16x128xf32>
      tpu.vector_store %arg12[%c0_52, %c8_53, %c0_54], %78 {strides = array<i32>} : memref<2x24x128xf32, #tpu.memory_space<vmem>>, vector<2x16x128xf32>,
    } else {
    }
    %c0 = arith.constant 0 : index
    %c8 = arith.constant 8 : index
    %c0_1 = arith.constant 0 : index
    %3 = vector.load %arg12[%c0, %c8, %c0_1] : memref<2x24x128xf32, #tpu.memory_space<vmem>>, vector<2x16x128xf32>
    %4 = vector.shape_cast %3 : vector<2x16x128xf32> to vector<32x128xf32>
    %5 = arith.truncf %4 : vector<32x128xf32> to vector<32x128xbf16>
    %c0_i32_2 = arith.constant 0 : i32
    %c0_i32_3 = arith.constant 0 : i32
    %6 = tpu.memref_slice %arg3[%arg1, %c0_i32_2, %c0_i32_3] : memref<3x640x256xbf16, #tpu.memory_space<vmem>> -> memref<1x640x256xbf16, #tpu.memory_space<vmem>>
    %7 = tpu.memref_squeeze %6 : memref<1x640x256xbf16, #tpu.memory_space<vmem>> -> memref<640x256xbf16, #tpu.memory_space<vmem>>
    %c512 = arith.constant 512 : index
    %c0_4 = arith.constant 0 : index
    %8 = vector.load %7[%c512, %c0_4] : memref<640x256xbf16, #tpu.memory_space<vmem>>, vector<128x256xbf16>
    %cst = arith.constant dense<0.000000e+00> : vector<32x256xf32>
    %9 = tpu.matmul %5, %8, %cst {dimension_numbers = #tpu.dot_dimension_numbers<[1], [0], [0], [1], [0, 0, 1, 1], [], []>} : vector<32x128xbf16>, vector<128x256xbf16>, vector<32x256xf32> -> vector<32x256xf32>
    %c0_5 = arith.constant 0 : index
    %c4 = arith.constant 4 : index
    %c0_6 = arith.constant 0 : index
    %10 = vector.load %arg12[%c0_5, %c4, %c0_6] : memref<2x24x128xf32, #tpu.memory_space<vmem>>, vector<2x16x128xf32>
    %11 = vector.shape_cast %10 : vector<2x16x128xf32> to vector<32x128xf32>
    %12 = arith.truncf %11 : vector<32x128xf32> to vector<32x128xbf16>
    %c0_i32_7 = arith.constant 0 : i32
    %c0_i32_8 = arith.constant 0 : i32
    %13 = tpu.memref_slice %arg3[%arg1, %c0_i32_7, %c0_i32_8] : memref<3x640x256xbf16, #tpu.memory_space<vmem>> -> memref<1x640x256xbf16, #tpu.memory_space<vmem>>
    %14 = tpu.memref_squeeze %13 : memref<1x640x256xbf16, #tpu.memory_space<vmem>> -> memref<640x256xbf16, #tpu.memory_space<vmem>>
    %c0_9 = arith.constant 0 : index
    %c0_10 = arith.constant 0 : index
    %15 = vector.load %14[%c0_9, %c0_10] : memref<640x256xbf16, #tpu.memory_space<vmem>>, vector<128x256xbf16>
    %cst_11 = arith.constant dense<0.000000e+00> : vector<32x256xf32>
    %16 = tpu.matmul %12, %15, %cst_11 {dimension_numbers = #tpu.dot_dimension_numbers<[1], [0], [0], [1], [0, 0, 1, 1], [], []>} : vector<32x128xbf16>, vector<128x256xbf16>, vector<32x256xf32> -> vector<32x256xf32>
    %17 = arith.addf %9, %16 : vector<32x256xf32>
    %c0_12 = arith.constant 0 : index
    %c5 = arith.constant 5 : index
    %c0_13 = arith.constant 0 : index
    %18 = vector.load %arg12[%c0_12, %c5, %c0_13] : memref<2x24x128xf32, #tpu.memory_space<vmem>>, vector<2x16x128xf32>
    %19 = vector.shape_cast %18 : vector<2x16x128xf32> to vector<32x128xf32>
    %20 = arith.truncf %19 : vector<32x128xf32> to vector<32x128xbf16>
    %c0_i32_14 = arith.constant 0 : i32
    %c0_i32_15 = arith.constant 0 : i32
    %21 = tpu.memref_slice %arg3[%arg1, %c0_i32_14, %c0_i32_15] : memref<3x640x256xbf16, #tpu.memory_space<vmem>> -> memref<1x640x256xbf16, #tpu.memory_space<vmem>>
    %22 = tpu.memref_squeeze %21 : memref<1x640x256xbf16, #tpu.memory_space<vmem>> -> memref<640x256xbf16, #tpu.memory_space<vmem>>
    %c128 = arith.constant 128 : index
    %c0_16 = arith.constant 0 : index
    %23 = vector.load %22[%c128, %c0_16] : memref<640x256xbf16, #tpu.memory_space<vmem>>, vector<128x256xbf16>
    %cst_17 = arith.constant dense<0.000000e+00> : vector<32x256xf32>
    %24 = tpu.matmul %20, %23, %cst_17 {dimension_numbers = #tpu.dot_dimension_numbers<[1], [0], [0], [1], [0, 0, 1, 1], [], []>} : vector<32x128xbf16>, vector<128x256xbf16>, vector<32x256xf32> -> vector<32x256xf32>
    %25 = arith.addf %17, %24 : vector<32x256xf32>
    %c0_18 = arith.constant 0 : index
    %c6 = arith.constant 6 : index
    %c0_19 = arith.constant 0 : index
    %26 = vector.load %arg12[%c0_18, %c6, %c0_19] : memref<2x24x128xf32, #tpu.memory_space<vmem>>, vector<2x16x128xf32>
    %27 = vector.shape_cast %26 : vector<2x16x128xf32> to vector<32x128xf32>
    %28 = arith.truncf %27 : vector<32x128xf32> to vector<32x128xbf16>
    %c0_i32_20 = arith.constant 0 : i32
    %c0_i32_21 = arith.constant 0 : i32
    %29 = tpu.memref_slice %arg3[%arg1, %c0_i32_20, %c0_i32_21] : memref<3x640x256xbf16, #tpu.memory_space<vmem>> -> memref<1x640x256xbf16, #tpu.memory_space<vmem>>
    %30 = tpu.memref_squeeze %29 : memref<1x640x256xbf16, #tpu.memory_space<vmem>> -> memref<640x256xbf16, #tpu.memory_space<vmem>>
    %c256 = arith.constant 256 : index
    %c0_22 = arith.constant 0 : index
    %31 = vector.load %30[%c256, %c0_22] : memref<640x256xbf16, #tpu.memory_space<vmem>>, vector<128x256xbf16>
    %cst_23 = arith.constant dense<0.000000e+00> : vector<32x256xf32>
    %32 = tpu.matmul %28, %31, %cst_23 {dimension_numbers = #tpu.dot_dimension_numbers<[1], [0], [0], [1], [0, 0, 1, 1], [], []>} : vector<32x128xbf16>, vector<128x256xbf16>, vector<32x256xf32> -> vector<32x256xf32>
    %33 = arith.addf %25, %32 : vector<32x256xf32>
    %c0_24 = arith.constant 0 : index
    %c7 = arith.constant 7 : index
    %c0_25 = arith.constant 0 : index
    %34 = vector.load %arg12[%c0_24, %c7, %c0_25] : memref<2x24x128xf32, #tpu.memory_space<vmem>>, vector<2x16x128xf32>
    %35 = vector.shape_cast %34 : vector<2x16x128xf32> to vector<32x128xf32>
    %36 = arith.truncf %35 : vector<32x128xf32> to vector<32x128xbf16>
    %c0_i32_26 = arith.constant 0 : i32
    %c0_i32_27 = arith.constant 0 : i32
    %37 = tpu.memref_slice %arg3[%arg1, %c0_i32_26, %c0_i32_27] : memref<3x640x256xbf16, #tpu.memory_space<vmem>> -> memref<1x640x256xbf16, #tpu.memory_space<vmem>>
    %38 = tpu.memref_squeeze %37 : memref<1x640x256xbf16, #tpu.memory_space<vmem>> -> memref<640x256xbf16, #tpu.memory_space<vmem>>
    %c384 = arith.constant 384 : index
    %c0_28 = arith.constant 0 : index
    %39 = vector.load %38[%c384, %c0_28] : memref<640x256xbf16, #tpu.memory_space<vmem>>, vector<128x256xbf16>
    %cst_29 = arith.constant dense<0.000000e+00> : vector<32x256xf32>
    %40 = tpu.matmul %36, %39, %cst_29 {dimension_numbers = #tpu.dot_dimension_numbers<[1], [0], [0], [1], [0, 0, 1, 1], [], []>} : vector<32x128xbf16>, vector<128x256xbf16>, vector<32x256xf32> -> vector<32x256xf32>
    %41 = arith.addf %33, %40 : vector<32x256xf32>
    %42 = arith.index_cast %arg1 : i32 to index
    %c0_30 = arith.constant 0 : index
    %c0_31 = arith.constant 0 : index
    %43 = vector.load %arg4[%42, %c0_30, %c0_31] : memref<3x1x256xf32, #tpu.memory_space<vmem>>, vector<1x1x256xf32>
    %44 = vector.shape_cast %43 : vector<1x1x256xf32> to vector<1x256xf32>
    %45 = vector.broadcast %44 : vector<1x256xf32> to vector<32x256xf32>
    %46 = arith.addf %41, %45 : vector<32x256xf32>
    %47 = vector.extract_strided_slice %46 {offsets = [0, 0], sizes = [32, 128], strides = [1, 1]} : vector<32x256xf32> to vector<32x128xf32>
    %48 = vector.extract_strided_slice %46 {offsets = [0, 128], sizes = [32, 128], strides = [1, 1]} : vector<32x256xf32> to vector<32x128xf32>
    %49 = math.tanh %47 : vector<32x128xf32>
    %cst_32 = arith.constant 5.000000e-01 : f32
    %50 = vector.broadcast %cst_32 : f32 to vector<32x128xf32>
    %51 = arith.mulf %50, %48 : vector<32x128xf32>
    %52 = math.tanh %51 : vector<32x128xf32>
    %cst_33 = arith.constant 1.000000e+00 : f32
    %53 = vector.broadcast %cst_33 : f32 to vector<32x128xf32>
    %54 = arith.addf %52, %53 : vector<32x128xf32>
    %cst_34 = arith.constant 5.000000e-01 : f32
    %55 = vector.broadcast %cst_34 : f32 to vector<32x128xf32>
    %56 = arith.mulf %55, %54 : vector<32x128xf32>
    %57 = arith.mulf %49, %56 : vector<32x128xf32>
    %58 = arith.truncf %57 : vector<32x128xf32> to vector<32x128xbf16>
    %59 = arith.index_cast %arg1 : i32 to index
    %c0_35 = arith.constant 0 : index
    %c0_36 = arith.constant 0 : index
    %60 = vector.load %arg5[%59, %c0_35, %c0_36] : memref<3x128x128xbf16, #tpu.memory_space<vmem>>, vector<1x128x128xbf16>
    %61 = vector.shape_cast %60 : vector<1x128x128xbf16> to vector<128x128xbf16>
    %cst_37 = arith.constant dense<0.000000e+00> : vector<32x128xf32>
    %62 = tpu.matmul %58, %61, %cst_37 {dimension_numbers = #tpu.dot_dimension_numbers<[1], [0], [0], [1], [0, 0, 1, 1], [], []>} : vector<32x128xbf16>, vector<128x128xbf16>, vector<32x128xf32> -> vector<32x128xf32>
    %63 = arith.index_cast %arg1 : i32 to index
    %c0_38 = arith.constant 0 : index
    %c0_39 = arith.constant 0 : index
    %64 = vector.load %arg6[%63, %c0_38, %c0_39] : memref<3x1x128xf32, #tpu.memory_space<vmem>>, vector<1x1x128xf32>
    %65 = vector.shape_cast %64 : vector<1x1x128xf32> to vector<1x128xf32>
    %66 = vector.broadcast %65 : vector<1x128xf32> to vector<32x128xf32>
    %67 = arith.addf %62, %66 : vector<32x128xf32>
    %c0_i32_40 = arith.constant 0 : i32
    %68 = arith.cmpi sgt, %arg1, %c0_i32_40 : i32
    %69 = arith.addf %67, %4 : vector<32x128xf32>
    %70 = arith.select %68, %69, %67 : vector<32x128xf32>
    %71 = vector.shape_cast %70 : vector<32x128xf32> to vector<2x16x128xf32>
    %c0_41 = arith.constant 0 : index
    %c8_42 = arith.constant 8 : index
    %c0_43 = arith.constant 0 : index
    %72 = vector.load %arg12[%c0_41, %c8_42, %c0_43] : memref<2x24x128xf32, #tpu.memory_space<vmem>>, vector<2x16x128xf32>
    tpu.vector_store %arg12[%c0_41, %c8_42, %c0_43], %71 {strides = array<i32>} : memref<2x24x128xf32, #tpu.memory_space<vmem>>, vector<2x16x128xf32>,
    %c2_i32 = arith.constant 2 : i32
    %73 = arith.cmpi eq, %arg1, %c2_i32 : i32
    %74 = arith.extui %73 : i1 to i32
    %c0_i32_44 = arith.constant 0 : i32
    %75 = arith.cmpi ne, %74, %c0_i32_44 : i32
    scf.if %75 {
      %76 = arith.truncf %70 : vector<32x128xf32> to vector<32x128xbf16>
      %c0_45 = arith.constant 0 : index
      %c0_46 = arith.constant 0 : index
      %77 = vector.load %arg7[%c0_45, %c0_46] : memref<128x256xbf16, #tpu.memory_space<vmem>>, vector<128x256xbf16>
      %cst_47 = arith.constant dense<0.000000e+00> : vector<32x256xf32>
      %78 = tpu.matmul %76, %77, %cst_47 {dimension_numbers = #tpu.dot_dimension_numbers<[1], [0], [0], [1], [0, 0, 1, 1], [], []>} : vector<32x128xbf16>, vector<128x256xbf16>, vector<32x256xf32> -> vector<32x256xf32>
      %c0_48 = arith.constant 0 : index
      %c0_49 = arith.constant 0 : index
      %79 = vector.load %arg8[%c0_48, %c0_49] : memref<1x256xf32, #tpu.memory_space<vmem>>, vector<1x256xf32>
      %80 = vector.broadcast %79 : vector<1x256xf32> to vector<32x256xf32>
      %81 = arith.addf %78, %80 : vector<32x256xf32>
      %cst_50 = arith.constant 0.000000e+00 : f32
      %82 = vector.broadcast %cst_50 : f32 to vector<32x256xf32>
      %83 = arith.maximumf %81, %82 : vector<32x256xf32>
      %84 = arith.truncf %83 : vector<32x256xf32> to vector<32x256xbf16>
      %c0_51 = arith.constant 0 : index
      %c0_52 = arith.constant 0 : index
      %85 = vector.load %arg9[%c0_51, %c0_52] : memref<256x128xbf16, #tpu.memory_space<vmem>>, vector<256x128xbf16>
      %cst_53 = arith.constant dense<0.000000e+00> : vector<32x128xf32>
      %86 = tpu.matmul %84, %85, %cst_53 {dimension_numbers = #tpu.dot_dimension_numbers<[1], [0], [0], [1], [0, 0, 1, 1], [], []>} : vector<32x256xbf16>, vector<256x128xbf16>, vector<32x128xf32> -> vector<32x128xf32>
      %c0_54 = arith.constant 0 : index
      %c0_55 = arith.constant 0 : index
      %87 = vector.load %arg10[%c0_54, %c0_55] : memref<1x128xf32, #tpu.memory_space<vmem>>, vector<1x128xf32>
      %88 = vector.broadcast %87 : vector<1x128xf32> to vector<32x128xf32>
      %89 = arith.addf %86, %88 : vector<32x128xf32>
      %90 = vector.shape_cast %89 : vector<32x128xf32> to vector<2x16x128xf32>
      %c0_56 = arith.constant 0 : index
      %c0_57 = arith.constant 0 : index
      %c0_58 = arith.constant 0 : index
      %91 = vector.load %arg11[%c0_56, %c0_57, %c0_58] : memref<2x16x128xf32, #tpu.memory_space<vmem>>, vector<2x16x128xf32>
      tpu.vector_store %arg11[%c0_56, %c0_57, %c0_58], %90 {strides = array<i32>} : memref<2x16x128xf32, #tpu.memory_space<vmem>>, vector<2x16x128xf32>,
    } else {
    }
    return
  }
  func.func @transform_0(%arg0: i32, %arg1: i32) -> (i32, i32, i32) {
    %c0_i32 = arith.constant 0 : i32
    %c0_i32_0 = arith.constant 0 : i32
    %c0_i32_1 = arith.constant 0 : i32
    return %arg0, %c0_i32, %c0_i32_0 : i32, i32, i32
  }
  func.func @transform_1(%arg0: i32, %arg1: i32) -> (i32, i32, i32) {
    %c0_i32 = arith.constant 0 : i32
    %c0_i32_0 = arith.constant 0 : i32
    %c0_i32_1 = arith.constant 0 : i32
    %c0_i32_2 = arith.constant 0 : i32
    return %c0_i32, %c0_i32_0, %c0_i32_1 : i32, i32, i32
  }
  func.func @transform_2(%arg0: i32, %arg1: i32) -> (i32, i32, i32) {
    %c0_i32 = arith.constant 0 : i32
    %c0_i32_0 = arith.constant 0 : i32
    %c0_i32_1 = arith.constant 0 : i32
    %c0_i32_2 = arith.constant 0 : i32
    return %c0_i32, %c0_i32_0, %c0_i32_1 : i32, i32, i32
  }
  func.func @transform_3(%arg0: i32, %arg1: i32) -> (i32, i32, i32) {
    %c0_i32 = arith.constant 0 : i32
    %c0_i32_0 = arith.constant 0 : i32
    %c0_i32_1 = arith.constant 0 : i32
    %c0_i32_2 = arith.constant 0 : i32
    return %c0_i32, %c0_i32_0, %c0_i32_1 : i32, i32, i32
  }
  func.func @transform_4(%arg0: i32, %arg1: i32) -> (i32, i32, i32) {
    %c0_i32 = arith.constant 0 : i32
    %c0_i32_0 = arith.constant 0 : i32
    %c0_i32_1 = arith.constant 0 : i32
    %c0_i32_2 = arith.constant 0 : i32
    return %c0_i32, %c0_i32_0, %c0_i32_1 : i32, i32, i32
  }
  func.func @transform_5(%arg0: i32, %arg1: i32) -> (i32, i32) {
    %c0_i32 = arith.constant 0 : i32
    %c0_i32_0 = arith.constant 0 : i32
    %c0_i32_1 = arith.constant 0 : i32
    return %c0_i32, %c0_i32_0 : i32, i32
  }
  func.func @transform_6(%arg0: i32, %arg1: i32) -> (i32, i32) {
    %c0_i32 = arith.constant 0 : i32
    %c0_i32_0 = arith.constant 0 : i32
    %c0_i32_1 = arith.constant 0 : i32
    return %c0_i32, %c0_i32_0 : i32, i32
  }
  func.func @transform_7(%arg0: i32, %arg1: i32) -> (i32, i32) {
    %c0_i32 = arith.constant 0 : i32
    %c0_i32_0 = arith.constant 0 : i32
    %c0_i32_1 = arith.constant 0 : i32
    return %c0_i32, %c0_i32_0 : i32, i32
  }
  func.func @transform_8(%arg0: i32, %arg1: i32) -> (i32, i32) {
    %c0_i32 = arith.constant 0 : i32
    %c0_i32_0 = arith.constant 0 : i32
    %c0_i32_1 = arith.constant 0 : i32
    return %c0_i32, %c0_i32_0 : i32, i32
  }
  func.func @transform_9(%arg0: i32, %arg1: i32) -> (i32, i32, i32) {
    %c0_i32 = arith.constant 0 : i32
    %c0_i32_0 = arith.constant 0 : i32
    %c0_i32_1 = arith.constant 0 : i32
    return %arg0, %c0_i32, %c0_i32_0 : i32, i32, i32
  }
}

</mosaic_0001>

<llo_original>
// kernel: tpu_custom_call.1
$region0: #{tpu_custom_call.1}
  #allocation0 [shape = 'u32[]', space=smem, size = 0x4, offset = 0x4, fixed_abs, tag = 'smem constant byte address 0x4 - core index']
  #allocation1 [shape = 'u32[72,128]{1,0:T(1,128)}', space=vmem, size = 0x9000, scoped, tag = 'internal scratch']
  #allocation2 [shape = 'f32[2,24,128]{2,1,0:T(8,128)}', space=vmem, size = 0x6000, scoped, tag = 'scratch operand']
  %s0 = inlined_call_operand.hbm [shape: f32[2,16,128], index: 0, kind: input, shape index: {}]
  %s1 = inlined_call_operand.hbm [shape: bf16[3,640,256], index: 1, kind: input, shape index: {}]
  %s2 = inlined_call_operand.hbm [shape: f32[3,1,256], index: 2, kind: input, shape index: {}]
  %s3 = inlined_call_operand.hbm [shape: bf16[3,128,128], index: 3, kind: input, shape index: {}]
  %s4 = inlined_call_operand.vmem [shape: f32[3,1,128], index: 4, kind: input, shape index: {}]
  %s5 = inlined_call_operand.hbm [shape: bf16[128,256], index: 5, kind: input, shape index: {}]
  %s6 = inlined_call_operand.vmem [shape: f32[1,256], index: 6, kind: input, shape index: {}]
  %s7 = inlined_call_operand.hbm [shape: bf16[256,128], index: 7, kind: input, shape index: {}]
  %s8 = inlined_call_operand.vmem [shape: f32[1,128], index: 8, kind: input, shape index: {}]
  %s9 = inlined_call_operand.hbm [shape: f32[2,16,128], index: 9, kind: output, shape index: {}]
  %s10 = sld [smem:[#allocation0]]
  $region101: #{tpu_custom_call.1} parent=0
    _
  %s12 = ssub.s32 1, %s10
  %s13 = scalar_select 0, %s12, %s10
  $region1: #{tpu_custom_call.1} parent=0
    #allocation3 [shape = 'u8[16384]{0}', space=vmem, size = 0x4000, scoped, tag = 'input window, operand 0, single buffered']
    #allocation4 [shape = 's32[2]{0}', space=sflag, size = 0x8, scoped, tag = 'scoped memory for tpu_custom_call.1']
    #allocation5 [shape = 's32[2]{0}', space=sflag, size = 0x8, scoped, tag = 'scoped memory for tpu_custom_call.1']
    #allocation6 [shape = 'u8[983040]{0}', space=vmem, size = 0xf0000, scoped, tag = 'input window, operand 1, single buffered']
    #allocation7 [shape = 's32[1]{0}', space=sflag, size = 0x4, scoped, tag = 'scoped memory for tpu_custom_call.1']
    #allocation8 [shape = 'u8[3072]{0}', space=vmem, size = 0xc00, scoped, tag = 'input window, operand 2, single buffered']
    #allocation9 [shape = 'u8[98304]{0}', space=vmem, size = 0x18000, scoped, tag = 'input window, operand 3, single buffered']
    #allocation10 [shape = 's32[1]{0}', space=sflag, size = 0x4, scoped, tag = 'scoped memory for tpu_custom_call.1']
    #allocation11 [shape = 'u8[65536]{0}', space=vmem, size = 0x10000, scoped, tag = 'input window, operand 5, single buffered']
    #allocation12 [shape = 'u8[65536]{0}', space=vmem, size = 0x10000, scoped, tag = 'input window, operand 7, single buffered']
    #allocation13 [shape = 's32[1]{0}', space=sflag, size = 0x4, scoped, tag = 'scoped memory for tpu_custom_call.1']
    #allocation14 [shape = 'u8[16384]{0}', space=vmem, size = 0x4000, scoped, tag = 'output window, operand 0, single buffered']
    %14 = vsyncpa [#allocation4], 0
    %15 = vsyncpa [#allocation7], 0
    %16 = vsyncpa [#allocation10], 0
    %17 = vsyncpa [#allocation13], 0
    %18 = vsyncpa [#allocation5], 0
    loop: start=0, step=1, limit=5
    $region2: #{tpu_custom_call.1} parent=1 // loop_pre_header
      _
    $region3: #{tpu_custom_call.1} parent=1 // loop_header
      %s20 = sphi 0, %s24
      %p21 = scmp.ge.s32.totalorder %s20, 5
      %s27 = sphi 0, %s39
      %s28 = sphi 0, %s35
      %s29 = sphi 0, %s27
      %s30 = sphi 0, %s28
      %s31 = sphi 0, %s29
      %s32 = sphi 0, %s30
      %s42 = sphi 0, %s44
      %s45 = sphi 0, %s42
      %s46 = sphi 0, %s45
      %s62 = sphi 0, %s46
      %s66 = sphi 0, %s66
      %s68 = sphi 0, %s66
      %s69 = sphi 0, %s68
      %s83 = sphi 0, %s69
      %s87 = sphi 0, %s87
      %s89 = sphi 0, %s87
      %s90 = sphi 0, %s89
      %s104 = sphi 0, %s90
      %s108 = sphi 0, %s108
      %s110 = sphi 0, %s108
      %s111 = sphi 0, %s110
      %s125 = sphi 0, %s111
      %s129 = sphi 0, %s129
      %s131 = sphi 0, %s129
      %s132 = sphi 0, %s131
      %s146 = sphi 0, %s132
      %s150 = sphi 0, %s150
      %s152 = sphi 0, %s150
      %s153 = sphi 0, %s152
      %s167 = sphi 0, %s153
      %s171 = sphi 0, %s171
      %s173 = sphi 0, %s171
      %s174 = sphi 0, %s173
      %s188 = sphi 0, %s174
      %s192 = sphi 0, %s192
      %s194 = sphi 0, %s192
      %s195 = sphi 0, %s194
      %s209 = sphi 0, %s195
      %s213 = sphi 0, %s213
      %s215 = sphi 0, %s213
      %s216 = sphi 0, %s215
      %s230 = sphi 0, %s216
      %s236 = sphi 0, %s238
      %s239 = sphi 0, %s236
      %s240 = sphi 0, %s239
      %s256 = sphi 0, %s240
    $region4: #{tpu_custom_call.1} parent=1 // loop_header_branch
      %23 = sbr.rel (%p21) target = $region8
    $region5: #{tpu_custom_call.1} parent=1 // loop_body
      %s25 = ssub.s32 %s20, 1
      %s26 = ssub.s32 %s20, 2
      %s33 = sadd.s32 1, %s28
      %p34 = scmp.ge.s32.totalorder %s33, 3
      %s35 = scalar_select %p34, 0, %s33
      %s36 = sadd.s32 1, %s27
      %s37 = scalar_select %p34, %s36, %s27
      %p38 = scmp.ge.s32.totalorder %s37, 1
      %s39 = scalar_select %p38, 0, %s37
      %s40 = ssub.s32 %s27, %s39
      %p41 = scmp.eq.s32.totalorder %s40, 0
      %s43 = sadd.s32 %s42, 1
      %s44 = scalar_select %p41, %s42, %s43
      %p47 = pneg %p41
      %p48 = scmp.eq.s32.totalorder %s20, 2
      %p49 = por %p47, %p48
      %p50 = scmp.ne.s32.totalorder %s42, %s45
      %p51 = scmp.eq.s32.totalorder %s20, 0
      %p52 = por %p50, %p51
      %p53 = scmp.ne.s32.totalorder %s42, %s45
      %p54 = scmp.eq.s32.totalorder %s25, 2
      %p55 = por %p53, %p54
      %p56 = scmp.ne.s32.totalorder %s45, %s46
      %p57 = scmp.eq.s32.totalorder %s25, 0
      %p58 = por %p56, %p57
      %p59 = scmp.ne.s32.totalorder %s45, %s46
      %p60 = scmp.eq.s32.totalorder %s26, 2
      %p61 = por %p59, %p60
      %p63 = scmp.ne.s32.totalorder %s46, %s62
      %p64 = scmp.eq.s32.totalorder %s26, 0
      %p65 = por %p63, %p64
      %s67 = sadd.s32 %s66, 1
      %p70 = scmp.eq.s32.totalorder %s20, 2
      %p71 = scmp.ne.s32.totalorder %s66, %s68
      %p72 = scmp.eq.s32.totalorder %s20, 0
      %p73 = por %p71, %p72
      %p74 = scmp.ne.s32.totalorder %s66, %s68
      %p75 = scmp.eq.s32.totalorder %s25, 2
      %p76 = por %p74, %p75
      %p77 = scmp.ne.s32.totalorder %s68, %s69
      %p78 = scmp.eq.s32.totalorder %s25, 0
      %p79 = por %p77, %p78
      %p80 = scmp.ne.s32.totalorder %s68, %s69
      %p81 = scmp.eq.s32.totalorder %s26, 2
      %p82 = por %p80, %p81
      %p84 = scmp.ne.s32.totalorder %s69, %s83
      %p85 = scmp.eq.s32.totalorder %s26, 0
      %p86 = por %p84, %p85
      %s88 = sadd.s32 %s87, 1
      %p91 = scmp.eq.s32.totalorder %s20, 2
      %p92 = scmp.ne.s32.totalorder %s87, %s89
      %p93 = scmp.eq.s32.totalorder %s20, 0
      %p94 = por %p92, %p93
      %p95 = scmp.ne.s32.totalorder %s87, %s89
      %p96 = scmp.eq.s32.totalorder %s25, 2
      %p97 = por %p95, %p96
      %p98 = scmp.ne.s32.totalorder %s89, %s90
      %p99 = scmp.eq.s32.totalorder %s25, 0
      %p100 = por %p98, %p99
      %p101 = scmp.ne.s32.totalorder %s89, %s90
      %p102 = scmp.eq.s32.totalorder %s26, 2
      %p103 = por %p101, %p102
      %p105 = scmp.ne.s32.totalorder %s90, %s104
      %p106 = scmp.eq.s32.totalorder %s26, 0
      %p107 = por %p105, %p106
      %s109 = sadd.s32 %s108, 1
      %p112 = scmp.eq.s32.totalorder %s20, 2
      %p113 = scmp.ne.s32.totalorder %s108, %s110
      %p114 = scmp.eq.s32.totalorder %s20, 0
      %p115 = por %p113, %p114
      %p116 = scmp.ne.s32.totalorder %s108, %s110
      %p117 = scmp.eq.s32.totalorder %s25, 2
      %p118 = por %p116, %p117
      %p119 = scmp.ne.s32.totalorder %s110, %s111
      %p120 = scmp.eq.s32.totalorder %s25, 0
      %p121 = por %p119, %p120
      %p122 = scmp.ne.s32.totalorder %s110, %s111
      %p123 = scmp.eq.s32.totalorder %s26, 2
      %p124 = por %p122, %p123
      %p126 = scmp.ne.s32.totalorder %s111, %s125
      %p127 = scmp.eq.s32.totalorder %s26, 0
      %p128 = por %p126, %p127
      %s130 = sadd.s32 %s129, 1
      %p133 = scmp.eq.s32.totalorder %s20, 2
      %p134 = scmp.ne.s32.totalorder %s129, %s131
      %p135 = scmp.eq.s32.totalorder %s20, 0
      %p136 = por %p134, %p135
      %p137 = scmp.ne.s32.totalorder %s129, %s131
      %p138 = scmp.eq.s32.totalorder %s25, 2
      %p139 = por %p137, %p138
      %p140 = scmp.ne.s32.totalorder %s131, %s132
      %p141 = scmp.eq.s32.totalorder %s25, 0
      %p142 = por %p140, %p141
      %p143 = scmp.ne.s32.totalorder %s131, %s132
      %p144 = scmp.eq.s32.totalorder %s26, 2
      %p145 = por %p143, %p144
      %p147 = scmp.ne.s32.totalorder %s132, %s146
      %p148 = scmp.eq.s32.totalorder %s26, 0
      %p149 = por %p147, %p148
      %s151 = sadd.s32 %s150, 1
      %p154 = scmp.eq.s32.totalorder %s20, 2
      %p155 = scmp.ne.s32.totalorder %s150, %s152
      %p156 = scmp.eq.s32.totalorder %s20, 0
      %p157 = por %p155, %p156
      %p158 = scmp.ne.s32.totalorder %s150, %s152
      %p159 = scmp.eq.s32.totalorder %s25, 2
      %p160 = por %p158, %p159
      %p161 = scmp.ne.s32.totalorder %s152, %s153
      %p162 = scmp.eq.s32.totalorder %s25, 0
      %p163 = por %p161, %p162
      %p164 = scmp.ne.s32.totalorder %s152, %s153
      %p165 = scmp.eq.s32.totalorder %s26, 2
      %p166 = por %p164, %p165
      %p168 = scmp.ne.s32.totalorder %s153, %s167
      %p169 = scmp.eq.s32.totalorder %s26, 0
      %p170 = por %p168, %p169
      %s172 = sadd.s32 %s171, 1
      %p175 = scmp.eq.s32.totalorder %s20, 2
      %p176 = scmp.ne.s32.totalorder %s171, %s173
      %p177 = scmp.eq.s32.totalorder %s20, 0
      %p178 = por %p176, %p177
      %p179 = scmp.ne.s32.totalorder %s171, %s173
      %p180 = scmp.eq.s32.totalorder %s25, 2
      %p181 = por %p179, %p180
      %p182 = scmp.ne.s32.totalorder %s173, %s174
      %p183 = scmp.eq.s32.totalorder %s25, 0
      %p184 = por %p182, %p183
      %p185 = scmp.ne.s32.totalorder %s173, %s174
      %p186 = scmp.eq.s32.totalorder %s26, 2
      %p187 = por %p185, %p186
      %p189 = scmp.ne.s32.totalorder %s174, %s188
      %p190 = scmp.eq.s32.totalorder %s26, 0
      %p191 = por %p189, %p190
      %s193 = sadd.s32 %s192, 1
      %p196 = scmp.eq.s32.totalorder %s20, 2
      %p197 = scmp.ne.s32.totalorder %s192, %s194
      %p198 = scmp.eq.s32.totalorder %s20, 0
      %p199 = por %p197, %p198
      %p200 = scmp.ne.s32.totalorder %s192, %s194
      %p201 = scmp.eq.s32.totalorder %s25, 2
      %p202 = por %p200, %p201
      %p203 = scmp.ne.s32.totalorder %s194, %s195
      %p204 = scmp.eq.s32.totalorder %s25, 0
      %p205 = por %p203, %p204
      %p206 = scmp.ne.s32.totalorder %s194, %s195
      %p207 = scmp.eq.s32.totalorder %s26, 2
      %p208 = por %p206, %p207
      %p210 = scmp.ne.s32.totalorder %s195, %s209
      %p211 = scmp.eq.s32.totalorder %s26, 0
      %p212 = por %p210, %p211
      %s214 = sadd.s32 %s213, 1
      %p217 = scmp.eq.s32.totalorder %s20, 2
      %p218 = scmp.ne.s32.totalorder %s213, %s215
      %p219 = scmp.eq.s32.totalorder %s20, 0
      %p220 = por %p218, %p219
      %p221 = scmp.ne.s32.totalorder %s213, %s215
      %p222 = scmp.eq.s32.totalorder %s25, 2
      %p223 = por %p221, %p222
      %p224 = scmp.ne.s32.totalorder %s215, %s216
      %p225 = scmp.eq.s32.totalorder %s25, 0
      %p226 = por %p224, %p225
      %p227 = scmp.ne.s32.totalorder %s215, %s216
      %p228 = scmp.eq.s32.totalorder %s26, 2
      %p229 = por %p227, %p228
      %p231 = scmp.ne.s32.totalorder %s216, %s230
      %p232 = scmp.eq.s32.totalorder %s26, 0
      %p233 = por %p231, %p232
      %s234 = ssub.s32 %s27, %s39
      %p235 = scmp.eq.s32.totalorder %s234, 0
      %s237 = sadd.s32 %s236, 1
      %s238 = scalar_select %p235, %s236, %s237
      %p241 = pneg %p235
      %p242 = scmp.eq.s32.totalorder %s20, 2
      %p243 = por %p241, %p242
      %p244 = scmp.ne.s32.totalorder %s236, %s239
      %p245 = scmp.eq.s32.totalorder %s20, 0
      %p246 = por %p244, %p245
      %p247 = scmp.ne.s32.totalorder %s236, %s239
      %p248 = scmp.eq.s32.totalorder %s25, 2
      %p249 = por %p247, %p248
      %p250 = scmp.ne.s32.totalorder %s239, %s240
      %p251 = scmp.eq.s32.totalorder %s25, 0
      %p252 = por %p250, %p251
      %p253 = scmp.ne.s32.totalorder %s239, %s240
      %p254 = scmp.eq.s32.totalorder %s26, 2
      %p255 = por %p253, %p254
      %p257 = scmp.ne.s32.totalorder %s240, %s256
      %p258 = scmp.eq.s32.totalorder %s26, 0
      %p259 = por %p257, %p258
      %p260 = scmp.le.s32.totalorder 1, %s20
      %p261 = scmp.lt.s32.totalorder %s20, 4
      %p262 = pnand %p260, %p261
      %p263 = pneg %p262
      // Predicated region
      $region9: #{tpu_custom_call.1} parent=5 // pred_check
        _
      $region10: #{tpu_custom_call.1} parent=5 // pred_check_branch
        %265 = sbr.rel (%p262) target = $region12
      $region11: #{tpu_custom_call.1} parent=5 // pred_region
        %s266 = ssub.s32 %s20, 1
        // Predicated region
        $region13: #{tpu_custom_call.1} parent=11 // pred_check
          %p267 = pneg %p58
        $region14: #{tpu_custom_call.1} parent=11 // pred_check_branch
          %269 = sbr.rel (%p267) target = $region16
        $region15: #{tpu_custom_call.1} parent=11 // pred_region
          %s270 = smul.u32 2, %s29
          %272 = vsyncadd [#allocation4], 0
          %s273 = smul.addr %s270, 2
          %s274 = smul.addr %s273, 8
          %s275 = scalar_lea.hbm %s0, %s274
          %s276 = sshll.u32 %s275, 4
          %s277 = int_to_ptr.hbm [resolvable:$true] %s276
          %s278 = sshll.u32 [#allocation3], 4
          %s279 = int_to_ptr.vmem [resolvable:$true] %s278
          %284 = dma.hbm_to_vmem [thread:$0]  %s277, 512, %s279, [#allocation4], 128, 128, 8
        $region16: #{tpu_custom_call.1} parent=11 // pred_fallthru
          _
        // Predicated region
        $region17: #{tpu_custom_call.1} parent=11 // pred_check
          %p285 = pneg %p79
        $region18: #{tpu_custom_call.1} parent=11 // pred_check_branch
          %287 = sbr.rel (%p285) target = $region20
        $region19: #{tpu_custom_call.1} parent=11 // pred_region
          %289 = vsyncadd [#allocation7], 0
          %s290 = sshll.u32 %s1, 4
          %s291 = int_to_ptr.hbm [resolvable:$true] %s290
          %s292 = sshll.u32 [#allocation6], 4
          %s293 = int_to_ptr.vmem [resolvable:$true] %s292
          %298 = dma.hbm_to_vmem [thread:$0]  %s291, 30720, %s293, [#allocation7], 128, 128, 8
        $region20: #{tpu_custom_call.1} parent=11 // pred_fallthru
          _
        // Predicated region
        $region21: #{tpu_custom_call.1} parent=11 // pred_check
          %p299 = pneg %p100
        $region22: #{tpu_custom_call.1} parent=11 // pred_check_branch
          %301 = sbr.rel (%p299) target = $region24
        $region23: #{tpu_custom_call.1} parent=11 // pred_region
          %303 = vsyncadd [#allocation7], 0
          %s304 = sshll.u32 %s2, 4
          %s305 = int_to_ptr.hbm [resolvable:$true] %s304
          %s306 = sshll.u32 [#allocation8], 4
          %s307 = int_to_ptr.vmem [resolvable:$true] %s306
          %312 = dma.hbm_to_vmem [thread:$0]  %s305, 96, %s307, [#allocation7], 32, 32, 2
        $region24: #{tpu_custom_call.1} parent=11 // pred_fallthru
          _
        // Predicated region
        $region25: #{tpu_custom_call.1} parent=11 // pred_check
          %p313 = pneg %p121
        $region26: #{tpu_custom_call.1} parent=11 // pred_check_branch
          %315 = sbr.rel (%p313) target = $region28
        $region27: #{tpu_custom_call.1} parent=11 // pred_region
          %317 = vsyncadd [#allocation10], 0
          %s318 = sshll.u32 %s3, 4
          %s319 = int_to_ptr.hbm [resolvable:$true] %s318
          %s320 = sshll.u32 [#allocation9], 4
          %s321 = int_to_ptr.vmem [resolvable:$true] %s320
          %326 = dma.hbm_to_vmem [thread:$0]  %s319, 3072, %s321, [#allocation10], 64, 64, 4
        $region28: #{tpu_custom_call.1} parent=11 // pred_fallthru
          _
        // Predicated region
        $region29: #{tpu_custom_call.1} parent=11 // pred_check
          %p327 = pneg %p142
        $region30: #{tpu_custom_call.1} parent=11 // pred_check_branch
          %329 = sbr.rel (%p327) target = $region32
        $region31: #{tpu_custom_call.1} parent=11 // pred_region
          _
        $region32: #{tpu_custom_call.1} parent=11 // pred_fallthru
          _
        // Predicated region
        $region33: #{tpu_custom_call.1} parent=11 // pred_check
          %p330 = pneg %p163
        $region34: #{tpu_custom_call.1} parent=11 // pred_check_branch
          %332 = sbr.rel (%p330) target = $region36
        $region35: #{tpu_custom_call.1} parent=11 // pred_region
          %334 = vsyncadd [#allocation10], 0
          %s335 = sshll.u32 %s5, 4
          %s336 = int_to_ptr.hbm [resolvable:$true] %s335
          %s337 = sshll.u32 [#allocation11], 4
          %s338 = int_to_ptr.vmem [resolvable:$true] %s337
          %343 = dma.hbm_to_vmem [thread:$0]  %s336, 2048, %s338, [#allocation10], 128, 128, 8
        $region36: #{tpu_custom_call.1} parent=11 // pred_fallthru
          _
        // Predicated region
        $region37: #{tpu_custom_call.1} parent=11 // pred_check
          %p344 = pneg %p184
        $region38: #{tpu_custom_call.1} parent=11 // pred_check_branch
          %346 = sbr.rel (%p344) target = $region40
        $region39: #{tpu_custom_call.1} parent=11 // pred_region
          _
        $region40: #{tpu_custom_call.1} parent=11 // pred_fallthru
          _
        // Predicated region
        $region41: #{tpu_custom_call.1} parent=11 // pred_check
          %p347 = pneg %p205
        $region42: #{tpu_custom_call.1} parent=11 // pred_check_branch
          %349 = sbr.rel (%p347) target = $region44
        $region43: #{tpu_custom_call.1} parent=11 // pred_region
          %351 = vsyncadd [#allocation13], 0
          %s352 = sshll.u32 %s7, 4
          %s353 = int_to_ptr.hbm [resolvable:$true] %s352
          %s354 = sshll.u32 [#allocation12], 4
          %s355 = int_to_ptr.vmem [resolvable:$true] %s354
          %360 = dma.hbm_to_vmem [thread:$0]  %s353, 2048, %s355, [#allocation13], 64, 64, 4
        $region44: #{tpu_custom_call.1} parent=11 // pred_fallthru
          _
        // Predicated region
        $region45: #{tpu_custom_call.1} parent=11 // pred_check
          %p361 = pneg %p226
        $region46: #{tpu_custom_call.1} parent=11 // pred_check_branch
          %363 = sbr.rel (%p361) target = $region48
        $region47: #{tpu_custom_call.1} parent=11 // pred_region
          _
        $region48: #{tpu_custom_call.1} parent=11 // pred_fallthru
          _
      $region12: #{tpu_custom_call.1} parent=5 // pred_fallthru
        _
      %p364 = scmp.lt.s32.totalorder %s20, 3
      // Predicated region
      $region49: #{tpu_custom_call.1} parent=5 // pred_check
        %p365 = pneg %p364
      $region50: #{tpu_custom_call.1} parent=5 // pred_check_branch
        %367 = sbr.rel (%p365) target = $region52
      $region51: #{tpu_custom_call.1} parent=5 // pred_region
        _
      $region52: #{tpu_custom_call.1} parent=5 // pred_fallthru
        _
      %p368 = scmp.le.s32.totalorder 1, %s20
      %p369 = scmp.lt.s32.totalorder %s20, 4
      %p370 = pnand %p368, %p369
      %p371 = pneg %p370
      // Predicated region
      $region53: #{tpu_custom_call.1} parent=5 // pred_check
        _
      $region54: #{tpu_custom_call.1} parent=5 // pred_check_branch
        %373 = sbr.rel (%p370) target = $region56
      $region55: #{tpu_custom_call.1} parent=5 // pred_region
        %s374 = ssub.s32 %s20, 1
        // Predicated region
        $region57: #{tpu_custom_call.1} parent=55 // pred_check
          %p375 = pneg %p58
        $region58: #{tpu_custom_call.1} parent=55 // pred_check_branch
          %377 = sbr.rel (%p375) target = $region60
        $region59: #{tpu_custom_call.1} parent=55 // pred_region
          %379 = dma.done [#allocation4], 512
        $region60: #{tpu_custom_call.1} parent=55 // pred_fallthru
          _
        // Predicated region
        $region61: #{tpu_custom_call.1} parent=55 // pred_check
          %p380 = pneg %p79
        $region62: #{tpu_custom_call.1} parent=55 // pred_check_branch
          %382 = sbr.rel (%p380) target = $region64
        $region63: #{tpu_custom_call.1} parent=55 // pred_region
          %384 = dma.done [#allocation7], 30720
        $region64: #{tpu_custom_call.1} parent=55 // pred_fallthru
          _
        // Predicated region
        $region65: #{tpu_custom_call.1} parent=55 // pred_check
          %p385 = pneg %p100
        $region66: #{tpu_custom_call.1} parent=55 // pred_check_branch
          %387 = sbr.rel (%p385) target = $region68
        $region67: #{tpu_custom_call.1} parent=55 // pred_region
          %389 = dma.done [#allocation7], 96
        $region68: #{tpu_custom_call.1} parent=55 // pred_fallthru
          _
        // Predicated region
        $region69: #{tpu_custom_call.1} parent=55 // pred_check
          %p390 = pneg %p121
        $region70: #{tpu_custom_call.1} parent=55 // pred_check_branch
          %392 = sbr.rel (%p390) target = $region72
        $region71: #{tpu_custom_call.1} parent=55 // pred_region
          %394 = dma.done [#allocation10], 3072
        $region72: #{tpu_custom_call.1} parent=55 // pred_fallthru
          _
        // Predicated region
        $region73: #{tpu_custom_call.1} parent=55 // pred_check
          %p395 = pneg %p163
        $region74: #{tpu_custom_call.1} parent=55 // pred_check_branch
          %397 = sbr.rel (%p395) target = $region76
        $region75: #{tpu_custom_call.1} parent=55 // pred_region
          %399 = dma.done [#allocation10], 2048
        $region76: #{tpu_custom_call.1} parent=55 // pred_fallthru
          _
        // Predicated region
        $region77: #{tpu_custom_call.1} parent=55 // pred_check
          %p400 = pneg %p205
        $region78: #{tpu_custom_call.1} parent=55 // pred_check_branch
          %402 = sbr.rel (%p400) target = $region80
        $region79: #{tpu_custom_call.1} parent=55 // pred_region
          %404 = dma.done [#allocation13], 2048
        $region80: #{tpu_custom_call.1} parent=55 // pred_fallthru
          _
        %p405 = pneg %p58
        %p406 = pneg %p55
        %p407 = pneg %p79
        %p408 = pneg %p76
        %p409 = pneg %p100
        %p410 = pneg %p97
        %p411 = pneg %p121
        %p412 = pneg %p118
        %p413 = pneg %p142
        %p414 = pneg %p139
        %p415 = pneg %p163
        %p416 = pneg %p160
        %p417 = pneg %p184
        %p418 = pneg %p181
        %p419 = pneg %p205
        %p420 = pneg %p202
        %p421 = pneg %p226
        %p422 = pneg %p223
        %p423 = pneg %p252
        %p424 = pneg %p249
        %s425 = smul.u32 2, %s29
        %s426 = smul.u32 2, %s29
        %p427 = scmp.eq.s32.totalorder %s30, 0
        // Predicated region
        $region81: #{tpu_custom_call.1} parent=55 // pred_check
          %p428 = pneg %p427
        $region82: #{tpu_custom_call.1} parent=55 // pred_check_branch
          %430 = sbr.rel (%p428) target = $region84
        $region83: #{tpu_custom_call.1} parent=55 // pred_region
          %431 = vst [vmem:[#allocation2] sm:$0xff] 0.0
          %432 = vst [vmem:[#allocation2 + $0x18] sm:$0xff] 0.0
          %v433 = vld [vmem:[#allocation3] sm:$0xff]
          %v434 = vld [vmem:[#allocation3 + $0x8] sm:$0xff]
          %v435 = vld [vmem:[#allocation3 + $0x10] sm:$0xff]
          %v436 = vld [vmem:[#allocation3 + $0x18] sm:$0xff]
          %437 = vst [vmem:[#allocation2 + $0x8] sm:$0xff] %v433
          %438 = vst [vmem:[#allocation2 + $0x10] sm:$0xff] %v434
          %439 = vst [vmem:[#allocation2 + $0x20] sm:$0xff] %v435
          %440 = vst [vmem:[#allocation2 + $0x28] sm:$0xff] %v436
        $region84: #{tpu_custom_call.1} parent=55 // pred_fallthru
          _
        %v441 = vld [vmem:[#allocation2 + $0x8] sm:$0xff]
        %v442 = vld [vmem:[#allocation2 + $0x10] sm:$0xff]
        %v443 = vld [vmem:[#allocation2 + $0x20] sm:$0xff]
        %v444 = vld [vmem:[#allocation2 + $0x28] sm:$0xff]
        %v445 = vpack.c.bf16 %v442, %v441
        %v446 = vpack.c.bf16 %v444, %v443
        %s447 = smul.u32 %s30, 160
        %s448 = smul.addr %s447, 4
        %s449 = scalar_lea.vmem [#allocation6], %s448
        %v450 = vld [vmem:[%s449 + $0x200] sm:$0xff]
        %v451 = vld [vmem:[%s449 + $0x208] sm:$0xff]
        %v452 = vld [vmem:[%s449 + $0x210] sm:$0xff]
        %v453 = vld [vmem:[%s449 + $0x218] sm:$0xff]
        %v454 = vld [vmem:[%s449 + $0x220] sm:$0xff]
        %v455 = vld [vmem:[%s449 + $0x228] sm:$0xff]
        %v456 = vld [vmem:[%s449 + $0x230] sm:$0xff]
        %v457 = vld [vmem:[%s449 + $0x238] sm:$0xff]
        %v458 = vld [vmem:[%s449 + $0x240] sm:$0xff]
        %v459 = vld [vmem:[%s449 + $0x248] sm:$0xff]
        %v460 = vld [vmem:[%s449 + $0x250] sm:$0xff]
        %v461 = vld [vmem:[%s449 + $0x258] sm:$0xff]
        %v462 = vld [vmem:[%s449 + $0x260] sm:$0xff]
        %v463 = vld [vmem:[%s449 + $0x268] sm:$0xff]
        %v464 = vld [vmem:[%s449 + $0x270] sm:$0xff]
        %v465 = vld [vmem:[%s449 + $0x278] sm:$0xff]
        %v466 = vld [vmem:[#allocation2 + $0x4] sm:$0xff]
        %v467 = vld [vmem:[#allocation2 + $0xc] sm:$0xff]
        %v468 = vld [vmem:[#allocation2 + $0x1c] sm:$0xff]
        %v469 = vld [vmem:[#allocation2 + $0x24] sm:$0xff]
        %v470 = vpack.c.bf16 %v467, %v466
        %v471 = vpack.c.bf16 %v469, %v468
        %v472 = vld [vmem:[%s449] sm:$0xff]
        %v473 = vld [vmem:[%s449 + $0x8] sm:$0xff]
        %v474 = vld [vmem:[%s449 + $0x10] sm:$0xff]
        %v475 = vld [vmem:[%s449 + $0x18] sm:$0xff]
        %v476 = vld [vmem:[%s449 + $0x20] sm:$0xff]
        %v477 = vld [vmem:[%s449 + $0x28] sm:$0xff]
        %v478 = vld [vmem:[%s449 + $0x30] sm:$0xff]
        %v479 = vld [vmem:[%s449 + $0x38] sm:$0xff]
        %v480 = vld [vmem:[%s449 + $0x40] sm:$0xff]
        %v481 = vld [vmem:[%s449 + $0x48] sm:$0xff]
        %v482 = vld [vmem:[%s449 + $0x50] sm:$0xff]
        %v483 = vld [vmem:[%s449 + $0x58] sm:$0xff]
        %v484 = vld [vmem:[%s449 + $0x60] sm:$0xff]
        %v485 = vld [vmem:[%s449 + $0x68] sm:$0xff]
        %v486 = vld [vmem:[%s449 + $0x70] sm:$0xff]
        %v487 = vld [vmem:[%s449 + $0x78] sm:$0xff]
        %v504 = vunpack.c.l.b16 %v472
        %v505 = vunpack.c.h.b16 %v472
        %v506 = vunpack.c.l.b16 %v473
        %v507 = vunpack.c.h.b16 %v473
        %v508 = vunpack.c.l.b16 %v474
        %v509 = vunpack.c.h.b16 %v474
        %v510 = vunpack.c.l.b16 %v475
        %v511 = vunpack.c.h.b16 %v475
        %v512 = vunpack.c.l.b16 %v476
        %v513 = vunpack.c.h.b16 %v476
        %v514 = vunpack.c.l.b16 %v477
        %v515 = vunpack.c.h.b16 %v477
        %v516 = vunpack.c.l.b16 %v478
        %v517 = vunpack.c.h.b16 %v478
        %v518 = vunpack.c.l.b16 %v479
        %v519 = vunpack.c.h.b16 %v479
        %v520 = vunpack.c.l.b16 %v480
        %v521 = vunpack.c.h.b16 %v480
        %v522 = vunpack.c.l.b16 %v481
        %v523 = vunpack.c.h.b16 %v481
        %v524 = vunpack.c.l.b16 %v482
        %v525 = vunpack.c.h.b16 %v482
        %v526 = vunpack.c.l.b16 %v483
        %v527 = vunpack.c.h.b16 %v483
        %v528 = vunpack.c.l.b16 %v484
        %v529 = vunpack.c.h.b16 %v484
        %v530 = vunpack.c.l.b16 %v485
        %v531 = vunpack.c.h.b16 %v485
        %v532 = vunpack.c.l.b16 %v486
        %v533 = vunpack.c.h.b16 %v486
        %v534 = vunpack.c.l.b16 %v487
        %v535 = vunpack.c.h.b16 %v487
        %v536 = vpack.c.b16 %v506, %v504
        %v537 = vpack.c.b16 %v507, %v505
        %v538 = vpack.c.b16 %v510, %v508
        %v539 = vpack.c.b16 %v511, %v509
        %v540 = vpack.c.b16 %v514, %v512
        %v541 = vpack.c.b16 %v515, %v513
        %v542 = vpack.c.b16 %v518, %v516
        %v543 = vpack.c.b16 %v519, %v517
        %v544 = vpack.c.b16 %v522, %v520
        %v545 = vpack.c.b16 %v523, %v521
        %v546 = vpack.c.b16 %v526, %v524
        %v547 = vpack.c.b16 %v527, %v525
        %v548 = vpack.c.b16 %v530, %v528
        %v549 = vpack.c.b16 %v531, %v529
        %v550 = vpack.c.b16 %v534, %v532
        %v551 = vpack.c.b16 %v535, %v533
        %568 = vmatpush.bf16.msra.mxu0 %v550
        %569 = vmatpush.bf16.msra.mxu0 %v548
        %570 = vmatpush.bf16.msra.mxu0 %v546
        %571 = vmatpush.bf16.msra.mxu0 %v544
        %572 = vmatpush.bf16.msra.mxu0 %v542
        %573 = vmatpush.bf16.msra.mxu0 %v540
        %574 = vmatpush.bf16.msra.mxu0 %v538
        %575 = vmatpush.bf16.msra.mxu0 %v536
        %576 = vmatmul.bf16.gmra.mxu0 %v470
        %v577 = vpop.f32.mrf.mxu0
        %v578 = vadd.f32 0.0, %v577
        %v579 = vpop.f32.mrf.mxu0
        %v580 = vadd.f32 0.0, %v579
        %581 = vmatmul.bf16.gmra.mxu0 %v471
        %v582 = vpop.f32.mrf.mxu0
        %v583 = vadd.f32 0.0, %v582
        %v584 = vpop.f32.mrf.mxu0
        %v585 = vadd.f32 0.0, %v584
        %586 = vdwg.mxu0
        %587 = vmatpush.bf16.msra.mxu0 %v551
        %588 = vmatpush.bf16.msra.mxu0 %v549
        %589 = vmatpush.bf16.msra.mxu0 %v547
        %590 = vmatpush.bf16.msra.mxu0 %v545
        %591 = vmatpush.bf16.msra.mxu0 %v543
        %592 = vmatpush.bf16.msra.mxu0 %v541
        %593 = vmatpush.bf16.msra.mxu0 %v539
        %594 = vmatpush.bf16.msra.mxu0 %v537
        %595 = vmatmul.bf16.gmra.mxu0 %v470
        %v596 = vpop.f32.mrf.mxu0
        %v597 = vadd.f32 0.0, %v596
        %v598 = vpop.f32.mrf.mxu0
        %v599 = vadd.f32 0.0, %v598
        %600 = vmatmul.bf16.gmra.mxu0 %v471
        %v601 = vpop.f32.mrf.mxu0
        %v602 = vadd.f32 0.0, %v601
        %v603 = vpop.f32.mrf.mxu0
        %v604 = vadd.f32 0.0, %v603
        %605 = vdwg.mxu0
        %v622 = vunpack.c.l.b16 %v450
        %v623 = vunpack.c.h.b16 %v450
        %v624 = vunpack.c.l.b16 %v451
        %v625 = vunpack.c.h.b16 %v451
        %v626 = vunpack.c.l.b16 %v452
        %v627 = vunpack.c.h.b16 %v452
        %v628 = vunpack.c.l.b16 %v453
        %v629 = vunpack.c.h.b16 %v453
        %v630 = vunpack.c.l.b16 %v454
        %v631 = vunpack.c.h.b16 %v454
        %v632 = vunpack.c.l.b16 %v455
        %v633 = vunpack.c.h.b16 %v455
        %v634 = vunpack.c.l.b16 %v456
        %v635 = vunpack.c.h.b16 %v456
        %v636 = vunpack.c.l.b16 %v457
        %v637 = vunpack.c.h.b16 %v457
        %v638 = vunpack.c.l.b16 %v458
        %v639 = vunpack.c.h.b16 %v458
        %v640 = vunpack.c.l.b16 %v459
        %v641 = vunpack.c.h.b16 %v459
        %v642 = vunpack.c.l.b16 %v460
        %v643 = vunpack.c.h.b16 %v460
        %v644 = vunpack.c.l.b16 %v461
        %v645 = vunpack.c.h.b16 %v461
        %v646 = vunpack.c.l.b16 %v462
        %v647 = vunpack.c.h.b16 %v462
        %v648 = vunpack.c.l.b16 %v463
        %v649 = vunpack.c.h.b16 %v463
        %v650 = vunpack.c.l.b16 %v464
        %v651 = vunpack.c.h.b16 %v464
        %v652 = vunpack.c.l.b16 %v465
        %v653 = vunpack.c.h.b16 %v465
        %v654 = vpack.c.b16 %v624, %v622
        %v655 = vpack.c.b16 %v625, %v623
        %v656 = vpack.c.b16 %v628, %v626
        %v657 = vpack.c.b16 %v629, %v627
        %v658 = vpack.c.b16 %v632, %v630
        %v659 = vpack.c.b16 %v633, %v631
        %v660 = vpack.c.b16 %v636, %v634
        %v661 = vpack.c.b16 %v637, %v635
        %v662 = vpack.c.b16 %v640, %v638
        %v663 = vpack.c.b16 %v641, %v639
        %v664 = vpack.c.b16 %v644, %v642
        %v665 = vpack.c.b16 %v645, %v643
        %v666 = vpack.c.b16 %v648, %v646
        %v667 = vpack.c.b16 %v649, %v647
        %v668 = vpack.c.b16 %v652, %v650
        %v669 = vpack.c.b16 %v653, %v651
        %686 = vmatpush.bf16.msra.mxu0 %v668
        %687 = vmatpush.bf16.msra.mxu0 %v666
        %688 = vmatpush.bf16.msra.mxu0 %v664
        %689 = vmatpush.bf16.msra.mxu0 %v662
        %690 = vmatpush.bf16.msra.mxu0 %v660
        %691 = vmatpush.bf16.msra.mxu0 %v658
        %692 = vmatpush.bf16.msra.mxu0 %v656
        %693 = vmatpush.bf16.msra.mxu0 %v654
        %694 = vmatmul.bf16.gmra.mxu0 %v445
        %v695 = vpop.f32.mrf.mxu0
        %v696 = vadd.f32 %v578, %v695
        %v697 = vpop.f32.mrf.mxu0
        %v698 = vadd.f32 %v580, %v697
        %699 = vmatmul.bf16.gmra.mxu0 %v446
        %v700 = vpop.f32.mrf.mxu0
        %v701 = vadd.f32 %v583, %v700
        %v702 = vpop.f32.mrf.mxu0
        %v703 = vadd.f32 %v585, %v702
        %704 = vdwg.mxu0
        %705 = vmatpush.bf16.msra.mxu0 %v669
        %706 = vmatpush.bf16.msra.mxu0 %v667
        %707 = vmatpush.bf16.msra.mxu0 %v665
        %708 = vmatpush.bf16.msra.mxu0 %v663
        %709 = vmatpush.bf16.msra.mxu0 %v661
        %710 = vmatpush.bf16.msra.mxu0 %v659
        %711 = vmatpush.bf16.msra.mxu0 %v657
        %712 = vmatpush.bf16.msra.mxu0 %v655
        %713 = vmatmul.bf16.gmra.mxu0 %v445
        %v714 = vpop.f32.mrf.mxu0
        %v715 = vadd.f32 %v597, %v714
        %v716 = vpop.f32.mrf.mxu0
        %v717 = vadd.f32 %v599, %v716
        %718 = vmatmul.bf16.gmra.mxu0 %v446
        %v719 = vpop.f32.mrf.mxu0
        %v720 = vadd.f32 %v602, %v719
        %v721 = vpop.f32.mrf.mxu0
        %v722 = vadd.f32 %v604, %v721
        %723 = vdwg.mxu0
        %v724 = vld [vmem:[#allocation2 + $0x5] sm:$0xff]
        %v725 = vld [vmem:[#allocation2 + $0xd] sm:$0xff]
        %v726 = vld [vmem:[#allocation2 + $0x1d] sm:$0xff]
        %v727 = vld [vmem:[#allocation2 + $0x25] sm:$0xff]
        %v728 = vpack.c.bf16 %v725, %v724
        %v729 = vpack.c.bf16 %v727, %v726
        %v730 = vld [vmem:[%s449 + $0x80] sm:$0xff]
        %v731 = vld [vmem:[%s449 + $0x88] sm:$0xff]
        %v732 = vld [vmem:[%s449 + $0x90] sm:$0xff]
        %v733 = vld [vmem:[%s449 + $0x98] sm:$0xff]
        %v734 = vld [vmem:[%s449 + $0xa0] sm:$0xff]
        %v735 = vld [vmem:[%s449 + $0xa8] sm:$0xff]
        %v736 = vld [vmem:[%s449 + $0xb0] sm:$0xff]
        %v737 = vld [vmem:[%s449 + $0xb8] sm:$0xff]
        %v738 = vld [vmem:[%s449 + $0xc0] sm:$0xff]
        %v739 = vld [vmem:[%s449 + $0xc8] sm:$0xff]
        %v740 = vld [vmem:[%s449 + $0xd0] sm:$0xff]
        %v741 = vld [vmem:[%s449 + $0xd8] sm:$0xff]
        %v742 = vld [vmem:[%s449 + $0xe0] sm:$0xff]
        %v743 = vld [vmem:[%s449 + $0xe8] sm:$0xff]
        %v744 = vld [vmem:[%s449 + $0xf0] sm:$0xff]
        %v745 = vld [vmem:[%s449 + $0xf8] sm:$0xff]
        %v762 = vunpack.c.l.b16 %v730
        %v763 = vunpack.c.h.b16 %v730
        %v764 = vunpack.c.l.b16 %v731
        %v765 = vunpack.c.h.b16 %v731
        %v766 = vunpack.c.l.b16 %v732
        %v767 = vunpack.c.h.b16 %v732
        %v768 = vunpack.c.l.b16 %v733
        %v769 = vunpack.c.h.b16 %v733
        %v770 = vunpack.c.l.b16 %v734
        %v771 = vunpack.c.h.b16 %v734
        %v772 = vunpack.c.l.b16 %v735
        %v773 = vunpack.c.h.b16 %v735
        %v774 = vunpack.c.l.b16 %v736
        %v775 = vunpack.c.h.b16 %v736
        %v776 = vunpack.c.l.b16 %v737
        %v777 = vunpack.c.h.b16 %v737
        %v778 = vunpack.c.l.b16 %v738
        %v779 = vunpack.c.h.b16 %v738
        %v780 = vunpack.c.l.b16 %v739
        %v781 = vunpack.c.h.b16 %v739
        %v782 = vunpack.c.l.b16 %v740
        %v783 = vunpack.c.h.b16 %v740
        %v784 = vunpack.c.l.b16 %v741
        %v785 = vunpack.c.h.b16 %v741
        %v786 = vunpack.c.l.b16 %v742
        %v787 = vunpack.c.h.b16 %v742
        %v788 = vunpack.c.l.b16 %v743
        %v789 = vunpack.c.h.b16 %v743
        %v790 = vunpack.c.l.b16 %v744
        %v791 = vunpack.c.h.b16 %v744
        %v792 = vunpack.c.l.b16 %v745
        %v793 = vunpack.c.h.b16 %v745
        %v794 = vpack.c.b16 %v764, %v762
        %v795 = vpack.c.b16 %v765, %v763
        %v796 = vpack.c.b16 %v768, %v766
        %v797 = vpack.c.b16 %v769, %v767
        %v798 = vpack.c.b16 %v772, %v770
        %v799 = vpack.c.b16 %v773, %v771
        %v800 = vpack.c.b16 %v776, %v774
        %v801 = vpack.c.b16 %v777, %v775
        %v802 = vpack.c.b16 %v780, %v778
        %v803 = vpack.c.b16 %v781, %v779
        %v804 = vpack.c.b16 %v784, %v782
        %v805 = vpack.c.b16 %v785, %v783
        %v806 = vpack.c.b16 %v788, %v786
        %v807 = vpack.c.b16 %v789, %v787
        %v808 = vpack.c.b16 %v792, %v790
        %v809 = vpack.c.b16 %v793, %v791
        %826 = vmatpush.bf16.msra.mxu0 %v808
        %827 = vmatpush.bf16.msra.mxu0 %v806
        %828 = vmatpush.bf16.msra.mxu0 %v804
        %829 = vmatpush.bf16.msra.mxu0 %v802
        %830 = vmatpush.bf16.msra.mxu0 %v800
        %831 = vmatpush.bf16.msra.mxu0 %v798
        %832 = vmatpush.bf16.msra.mxu0 %v796
        %833 = vmatpush.bf16.msra.mxu0 %v794
        %834 = vmatmul.bf16.gmra.mxu0 %v728
        %v835 = vpop.f32.mrf.mxu0
        %v836 = vadd.f32 0.0, %v835
        %v837 = vpop.f32.mrf.mxu0
        %v838 = vadd.f32 0.0, %v837
        %839 = vmatmul.bf16.gmra.mxu0 %v729
        %v840 = vpop.f32.mrf.mxu0
        %v841 = vadd.f32 0.0, %v840
        %v842 = vpop.f32.mrf.mxu0
        %v843 = vadd.f32 0.0, %v842
        %844 = vdwg.mxu0
        %845 = vmatpush.bf16.msra.mxu0 %v809
        %846 = vmatpush.bf16.msra.mxu0 %v807
        %847 = vmatpush.bf16.msra.mxu0 %v805
        %848 = vmatpush.bf16.msra.mxu0 %v803
        %849 = vmatpush.bf16.msra.mxu0 %v801
        %850 = vmatpush.bf16.msra.mxu0 %v799
        %851 = vmatpush.bf16.msra.mxu0 %v797
        %852 = vmatpush.bf16.msra.mxu0 %v795
        %853 = vmatmul.bf16.gmra.mxu0 %v728
        %v854 = vpop.f32.mrf.mxu0
        %v855 = vadd.f32 0.0, %v854
        %v856 = vpop.f32.mrf.mxu0
        %v857 = vadd.f32 0.0, %v856
        %858 = vmatmul.bf16.gmra.mxu0 %v729
        %v859 = vpop.f32.mrf.mxu0
        %v860 = vadd.f32 0.0, %v859
        %v861 = vpop.f32.mrf.mxu0
        %v862 = vadd.f32 0.0, %v861
        %863 = vdwg.mxu0
        %v864 = vadd.f32 %v696, %v836
        %v865 = vadd.f32 %v715, %v855
        %v866 = vadd.f32 %v698, %v838
        %v867 = vadd.f32 %v717, %v857
        %v868 = vadd.f32 %v701, %v841
        %v869 = vadd.f32 %v720, %v860
        %v870 = vadd.f32 %v703, %v843
        %v871 = vadd.f32 %v722, %v862
        %v872 = vld [vmem:[#allocation2 + $0x6] sm:$0xff]
        %v873 = vld [vmem:[#allocation2 + $0xe] sm:$0xff]
        %v874 = vld [vmem:[#allocation2 + $0x1e] sm:$0xff]
        %v875 = vld [vmem:[#allocation2 + $0x26] sm:$0xff]
        %v876 = vpack.c.bf16 %v873, %v872
        %v877 = vpack.c.bf16 %v875, %v874
        %v878 = vld [vmem:[%s449 + $0x100] sm:$0xff]
        %v879 = vld [vmem:[%s449 + $0x108] sm:$0xff]
        %v880 = vld [vmem:[%s449 + $0x110] sm:$0xff]
        %v881 = vld [vmem:[%s449 + $0x118] sm:$0xff]
        %v882 = vld [vmem:[%s449 + $0x120] sm:$0xff]
        %v883 = vld [vmem:[%s449 + $0x128] sm:$0xff]
        %v884 = vld [vmem:[%s449 + $0x130] sm:$0xff]
        %v885 = vld [vmem:[%s449 + $0x138] sm:$0xff]
        %v886 = vld [vmem:[%s449 + $0x140] sm:$0xff]
        %v887 = vld [vmem:[%s449 + $0x148] sm:$0xff]
        %v888 = vld [vmem:[%s449 + $0x150] sm:$0xff]
        %v889 = vld [vmem:[%s449 + $0x158] sm:$0xff]
        %v890 = vld [vmem:[%s449 + $0x160] sm:$0xff]
        %v891 = vld [vmem:[%s449 + $0x168] sm:$0xff]
        %v892 = vld [vmem:[%s449 + $0x170] sm:$0xff]
        %v893 = vld [vmem:[%s449 + $0x178] sm:$0xff]
        %v910 = vunpack.c.l.b16 %v878
        %v911 = vunpack.c.h.b16 %v878
        %v912 = vunpack.c.l.b16 %v879
        %v913 = vunpack.c.h.b16 %v879
        %v914 = vunpack.c.l.b16 %v880
        %v915 = vunpack.c.h.b16 %v880
        %v916 = vunpack.c.l.b16 %v881
        %v917 = vunpack.c.h.b16 %v881
        %v918 = vunpack.c.l.b16 %v882
        %v919 = vunpack.c.h.b16 %v882
        %v920 = vunpack.c.l.b16 %v883
        %v921 = vunpack.c.h.b16 %v883
        %v922 = vunpack.c.l.b16 %v884
        %v923 = vunpack.c.h.b16 %v884
        %v924 = vunpack.c.l.b16 %v885
        %v925 = vunpack.c.h.b16 %v885
        %v926 = vunpack.c.l.b16 %v886
        %v927 = vunpack.c.h.b16 %v886
        %v928 = vunpack.c.l.b16 %v887
        %v929 = vunpack.c.h.b16 %v887
        %v930 = vunpack.c.l.b16 %v888
        %v931 = vunpack.c.h.b16 %v888
        %v932 = vunpack.c.l.b16 %v889
        %v933 = vunpack.c.h.b16 %v889
        %v934 = vunpack.c.l.b16 %v890
        %v935 = vunpack.c.h.b16 %v890
        %v936 = vunpack.c.l.b16 %v891
        %v937 = vunpack.c.h.b16 %v891
        %v938 = vunpack.c.l.b16 %v892
        %v939 = vunpack.c.h.b16 %v892
        %v940 = vunpack.c.l.b16 %v893
        %v941 = vunpack.c.h.b16 %v893
        %v942 = vpack.c.b16 %v912, %v910
        %v943 = vpack.c.b16 %v913, %v911
        %v944 = vpack.c.b16 %v916, %v914
        %v945 = vpack.c.b16 %v917, %v915
        %v946 = vpack.c.b16 %v920, %v918
        %v947 = vpack.c.b16 %v921, %v919
        %v948 = vpack.c.b16 %v924, %v922
        %v949 = vpack.c.b16 %v925, %v923
        %v950 = vpack.c.b16 %v928, %v926
        %v951 = vpack.c.b16 %v929, %v927
        %v952 = vpack.c.b16 %v932, %v930
        %v953 = vpack.c.b16 %v933, %v931
        %v954 = vpack.c.b16 %v936, %v934
        %v955 = vpack.c.b16 %v937, %v935
        %v956 = vpack.c.b16 %v940, %v938
        %v957 = vpack.c.b16 %v941, %v939
        %974 = vmatpush.bf16.msra.mxu0 %v956
        %975 = vmatpush.bf16.msra.mxu0 %v954
        %976 = vmatpush.bf16.msra.mxu0 %v952
        %977 = vmatpush.bf16.msra.mxu0 %v950
        %978 = vmatpush.bf16.msra.mxu0 %v948
        %979 = vmatpush.bf16.msra.mxu0 %v946
        %980 = vmatpush.bf16.msra.mxu0 %v944
        %981 = vmatpush.bf16.msra.mxu0 %v942
        %982 = vmatmul.bf16.gmra.mxu0 %v876
        %v983 = vpop.f32.mrf.mxu0
        %v984 = vadd.f32 0.0, %v983
        %v985 = vpop.f32.mrf.mxu0
        %v986 = vadd.f32 0.0, %v985
        %987 = vmatmul.bf16.gmra.mxu0 %v877
        %v988 = vpop.f32.mrf.mxu0
        %v989 = vadd.f32 0.0, %v988
        %v990 = vpop.f32.mrf.mxu0
        %v991 = vadd.f32 0.0, %v990
        %992 = vdwg.mxu0
        %993 = vmatpush.bf16.msra.mxu0 %v957
        %994 = vmatpush.bf16.msra.mxu0 %v955
        %995 = vmatpush.bf16.msra.mxu0 %v953
        %996 = vmatpush.bf16.msra.mxu0 %v951
        %997 = vmatpush.bf16.msra.mxu0 %v949
        %998 = vmatpush.bf16.msra.mxu0 %v947
        %999 = vmatpush.bf16.msra.mxu0 %v945
        %1000 = vmatpush.bf16.msra.mxu0 %v943
        %1001 = vmatmul.bf16.gmra.mxu0 %v876
        %v1002 = vpop.f32.mrf.mxu0
        %v1003 = vadd.f32 0.0, %v1002
        %v1004 = vpop.f32.mrf.mxu0
        %v1005 = vadd.f32 0.0, %v1004
        %1006 = vmatmul.bf16.gmra.mxu0 %v877
        %v1007 = vpop.f32.mrf.mxu0
        %v1008 = vadd.f32 0.0, %v1007
        %v1009 = vpop.f32.mrf.mxu0
        %v1010 = vadd.f32 0.0, %v1009
        %1011 = vdwg.mxu0
        %v1012 = vadd.f32 %v864, %v984
        %v1013 = vadd.f32 %v865, %v1003
        %v1014 = vadd.f32 %v866, %v986
        %v1015 = vadd.f32 %v867, %v1005
        %v1016 = vadd.f32 %v868, %v989
        %v1017 = vadd.f32 %v869, %v1008
        %v1018 = vadd.f32 %v870, %v991
        %v1019 = vadd.f32 %v871, %v1010
        %v1020 = vld [vmem:[#allocation2 + $0x7] sm:$0xff]
        %v1021 = vld [vmem:[#allocation2 + $0xf] sm:$0xff]
        %v1022 = vld [vmem:[#allocation2 + $0x1f] sm:$0xff]
        %v1023 = vld [vmem:[#allocation2 + $0x27] sm:$0xff]
        %v1024 = vpack.c.bf16 %v1021, %v1020
        %v1025 = vpack.c.bf16 %v1023, %v1022
        %v1026 = vld [vmem:[%s449 + $0x180] sm:$0xff]
        %v1027 = vld [vmem:[%s449 + $0x188] sm:$0xff]
        %v1028 = vld [vmem:[%s449 + $0x190] sm:$0xff]
        %v1029 = vld [vmem:[%s449 + $0x198] sm:$0xff]
        %v1030 = vld [vmem:[%s449 + $0x1a0] sm:$0xff]
        %v1031 = vld [vmem:[%s449 + $0x1a8] sm:$0xff]
        %v1032 = vld [vmem:[%s449 + $0x1b0] sm:$0xff]
        %v1033 = vld [vmem:[%s449 + $0x1b8] sm:$0xff]
        %v1034 = vld [vmem:[%s449 + $0x1c0] sm:$0xff]
        %v1035 = vld [vmem:[%s449 + $0x1c8] sm:$0xff]
        %v1036 = vld [vmem:[%s449 + $0x1d0] sm:$0xff]
        %v1037 = vld [vmem:[%s449 + $0x1d8] sm:$0xff]
        %v1038 = vld [vmem:[%s449 + $0x1e0] sm:$0xff]
        %v1039 = vld [vmem:[%s449 + $0x1e8] sm:$0xff]
        %v1040 = vld [vmem:[%s449 + $0x1f0] sm:$0xff]
        %v1041 = vld [vmem:[%s449 + $0x1f8] sm:$0xff]
        %v1058 = vunpack.c.l.b16 %v1026
        %v1059 = vunpack.c.h.b16 %v1026
        %v1060 = vunpack.c.l.b16 %v1027
        %v1061 = vunpack.c.h.b16 %v1027
        %v1062 = vunpack.c.l.b16 %v1028
        %v1063 = vunpack.c.h.b16 %v1028
        %v1064 = vunpack.c.l.b16 %v1029
        %v1065 = vunpack.c.h.b16 %v1029
        %v1066 = vunpack.c.l.b16 %v1030
        %v1067 = vunpack.c.h.b16 %v1030
        %v1068 = vunpack.c.l.b16 %v1031
        %v1069 = vunpack.c.h.b16 %v1031
        %v1070 = vunpack.c.l.b16 %v1032
        %v1071 = vunpack.c.h.b16 %v1032
        %v1072 = vunpack.c.l.b16 %v1033
        %v1073 = vunpack.c.h.b16 %v1033
        %v1074 = vunpack.c.l.b16 %v1034
        %v1075 = vunpack.c.h.b16 %v1034
        %v1076 = vunpack.c.l.b16 %v1035
        %v1077 = vunpack.c.h.b16 %v1035
        %v1078 = vunpack.c.l.b16 %v1036
        %v1079 = vunpack.c.h.b16 %v1036
        %v1080 = vunpack.c.l.b16 %v1037
        %v1081 = vunpack.c.h.b16 %v1037
        %v1082 = vunpack.c.l.b16 %v1038
        %v1083 = vunpack.c.h.b16 %v1038
        %v1084 = vunpack.c.l.b16 %v1039
        %v1085 = vunpack.c.h.b16 %v1039
        %v1086 = vunpack.c.l.b16 %v1040
        %v1087 = vunpack.c.h.b16 %v1040
        %v1088 = vunpack.c.l.b16 %v1041
        %v1089 = vunpack.c.h.b16 %v1041
        %v1090 = vpack.c.b16 %v1060, %v1058
        %v1091 = vpack.c.b16 %v1061, %v1059
        %v1092 = vpack.c.b16 %v1064, %v1062
        %v1093 = vpack.c.b16 %v1065, %v1063
        %v1094 = vpack.c.b16 %v1068, %v1066
        %v1095 = vpack.c.b16 %v1069, %v1067
        %v1096 = vpack.c.b16 %v1072, %v1070
        %v1097 = vpack.c.b16 %v1073, %v1071
        %v1098 = vpack.c.b16 %v1076, %v1074
        %v1099 = vpack.c.b16 %v1077, %v1075
        %v1100 = vpack.c.b16 %v1080, %v1078
        %v1101 = vpack.c.b16 %v1081, %v1079
        %v1102 = vpack.c.b16 %v1084, %v1082
        %v1103 = vpack.c.b16 %v1085, %v1083
        %v1104 = vpack.c.b16 %v1088, %v1086
        %v1105 = vpack.c.b16 %v1089, %v1087
        %1122 = vmatpush.bf16.msra.mxu0 %v1104
        %1123 = vmatpush.bf16.msra.mxu0 %v1102
        %1124 = vmatpush.bf16.msra.mxu0 %v1100
        %1125 = vmatpush.bf16.msra.mxu0 %v1098
        %1126 = vmatpush.bf16.msra.mxu0 %v1096
        %1127 = vmatpush.bf16.msra.mxu0 %v1094
        %1128 = vmatpush.bf16.msra.mxu0 %v1092
        %1129 = vmatpush.bf16.msra.mxu0 %v1090
        %1130 = vmatmul.bf16.gmra.mxu0 %v1024
        %v1131 = vpop.f32.mrf.mxu0
        %v1132 = vadd.f32 0.0, %v1131
        %v1133 = vpop.f32.mrf.mxu0
        %v1134 = vadd.f32 0.0, %v1133
        %1135 = vmatmul.bf16.gmra.mxu0 %v1025
        %v1136 = vpop.f32.mrf.mxu0
        %v1137 = vadd.f32 0.0, %v1136
        %v1138 = vpop.f32.mrf.mxu0
        %v1139 = vadd.f32 0.0, %v1138
        %1140 = vdwg.mxu0
        %1141 = vmatpush.bf16.msra.mxu0 %v1105
        %1142 = vmatpush.bf16.msra.mxu0 %v1103
        %1143 = vmatpush.bf16.msra.mxu0 %v1101
        %1144 = vmatpush.bf16.msra.mxu0 %v1099
        %1145 = vmatpush.bf16.msra.mxu0 %v1097
        %1146 = vmatpush.bf16.msra.mxu0 %v1095
        %1147 = vmatpush.bf16.msra.mxu0 %v1093
        %1148 = vmatpush.bf16.msra.mxu0 %v1091
        %1149 = vmatmul.bf16.gmra.mxu0 %v1024
        %v1150 = vpop.f32.mrf.mxu0
        %v1151 = vadd.f32 0.0, %v1150
        %v1152 = vpop.f32.mrf.mxu0
        %v1153 = vadd.f32 0.0, %v1152
        %1154 = vmatmul.bf16.gmra.mxu0 %v1025
        %v1155 = vpop.f32.mrf.mxu0
        %v1156 = vadd.f32 0.0, %v1155
        %v1157 = vpop.f32.mrf.mxu0
        %v1158 = vadd.f32 0.0, %v1157
        %1159 = vdwg.mxu0
        %v1160 = vadd.f32 %v1012, %v1132
        %v1161 = vadd.f32 %v1013, %v1151
        %v1162 = vadd.f32 %v1014, %v1134
        %v1163 = vadd.f32 %v1015, %v1153
        %v1164 = vadd.f32 %v1016, %v1137
        %v1165 = vadd.f32 %v1017, %v1156
        %v1166 = vadd.f32 %v1018, %v1139
        %v1167 = vadd.f32 %v1019, %v1158
        %s1168 = smul.u32 %s30, 2
        %s1169 = scalar_lea.vmem [#allocation8], %s1168
        %v1170 = vld [vmem:[%s1169] sm:$0x3]
        %v1172 = vperm.slane %v1170, 0
        %v1173 = vperm.slane %v1170, 1
        %v1176 = vadd.f32 %v1160, %v1172
        %v1177 = vadd.f32 %v1161, %v1173
        %v1178 = vadd.f32 %v1162, %v1172
        %v1179 = vadd.f32 %v1163, %v1173
        %v1180 = vadd.f32 %v1164, %v1172
        %v1181 = vadd.f32 %v1165, %v1173
        %v1182 = vadd.f32 %v1166, %v1172
        %v1183 = vadd.f32 %v1167, %v1173
        %v1184 = vtanh.pop %v1176
        %v1185 = vtanh.pop %v1178
        %v1186 = vtanh.pop %v1180
        %v1187 = vtanh.pop %v1182
        %v1188 = vmul.f32 %v1177, 0.5
        %v1189 = vmul.f32 %v1179, 0.5
        %v1190 = vmul.f32 %v1181, 0.5
        %v1191 = vmul.f32 %v1183, 0.5
        %v1192 = vtanh.pop %v1188
        %v1193 = vtanh.pop %v1189
        %v1194 = vtanh.pop %v1190
        %v1195 = vtanh.pop %v1191
        %v1196 = vadd.f32 %v1192, 1.0
        %v1197 = vadd.f32 %v1193, 1.0
        %v1198 = vadd.f32 %v1194, 1.0
        %v1199 = vadd.f32 %v1195, 1.0
        %v1200 = vmul.f32 %v1196, 0.5
        %v1201 = vmul.f32 %v1197, 0.5
        %v1202 = vmul.f32 %v1198, 0.5
        %v1203 = vmul.f32 %v1199, 0.5
        %v1204 = vmul.f32 %v1184, %v1200
        %v1205 = vmul.f32 %v1185, %v1201
        %v1206 = vmul.f32 %v1186, %v1202
        %v1207 = vmul.f32 %v1187, %v1203
        %v1208 = vpack.c.bf16 %v1205, %v1204
        %v1209 = vpack.c.bf16 %v1207, %v1206
        %s1210 = smul.u32 %s30, 16
        %s1211 = smul.addr %s1210, 4
        %s1212 = scalar_lea.vmem [#allocation9], %s1211
        %v1213 = vld [vmem:[%s1212] sm:$0xf]
        %v1214 = vld [vmem:[%s1212 + $0x4] sm:$0xf]
        %v1215 = vld [vmem:[%s1212 + $0x8] sm:$0xf]
        %v1216 = vld [vmem:[%s1212 + $0xc] sm:$0xf]
        %v1217 = vld [vmem:[%s1212 + $0x10] sm:$0xf]
        %v1218 = vld [vmem:[%s1212 + $0x14] sm:$0xf]
        %v1219 = vld [vmem:[%s1212 + $0x18] sm:$0xf]
        %v1220 = vld [vmem:[%s1212 + $0x1c] sm:$0xf]
        %v1221 = vld [vmem:[%s1212 + $0x20] sm:$0xf]
        %v1222 = vld [vmem:[%s1212 + $0x24] sm:$0xf]
        %v1223 = vld [vmem:[%s1212 + $0x28] sm:$0xf]
        %v1224 = vld [vmem:[%s1212 + $0x2c] sm:$0xf]
        %v1225 = vld [vmem:[%s1212 + $0x30] sm:$0xf]
        %v1226 = vld [vmem:[%s1212 + $0x34] sm:$0xf]
        %v1227 = vld [vmem:[%s1212 + $0x38] sm:$0xf]
        %v1228 = vld [vmem:[%s1212 + $0x3c] sm:$0xf]
        %s1229 = scalar_lea.vmem %s4, %s30
        %v1230 = vld [vmem:[%s1229] sm:$0x1]
        %v1232 = vperm.slane %v1230, 0
        %v1250 = vunpack.c.l.b16 %v1213
        %v1251 = vunpack.c.l.b16 %v1214
        %v1252 = vunpack.c.l.b16 %v1215
        %v1253 = vunpack.c.l.b16 %v1216
        %v1254 = vunpack.c.l.b16 %v1217
        %v1255 = vunpack.c.l.b16 %v1218
        %v1256 = vunpack.c.l.b16 %v1219
        %v1257 = vunpack.c.l.b16 %v1220
        %v1258 = vunpack.c.l.b16 %v1221
        %v1259 = vunpack.c.l.b16 %v1222
        %v1260 = vunpack.c.l.b16 %v1223
        %v1261 = vunpack.c.l.b16 %v1224
        %v1262 = vunpack.c.l.b16 %v1225
        %v1263 = vunpack.c.l.b16 %v1226
        %v1264 = vunpack.c.l.b16 %v1227
        %v1265 = vunpack.c.l.b16 %v1228
        %v1266 = vpack.c.b16 %v1251, %v1250
        %v1267 = vpack.c.b16 %v1253, %v1252
        %v1268 = vpack.c.b16 %v1255, %v1254
        %v1269 = vpack.c.b16 %v1257, %v1256
        %v1270 = vpack.c.b16 %v1259, %v1258
        %v1271 = vpack.c.b16 %v1261, %v1260
        %v1272 = vpack.c.b16 %v1263, %v1262
        %v1273 = vpack.c.b16 %v1265, %v1264
        %1282 = vmatpush.bf16.msra.mxu0 %v1273
        %1283 = vmatpush.bf16.msra.mxu0 %v1272
        %1284 = vmatpush.bf16.msra.mxu0 %v1271
        %1285 = vmatpush.bf16.msra.mxu0 %v1270
        %1286 = vmatpush.bf16.msra.mxu0 %v1269
        %1287 = vmatpush.bf16.msra.mxu0 %v1268
        %1288 = vmatpush.bf16.msra.mxu0 %v1267
        %1289 = vmatpush.bf16.msra.mxu0 %v1266
        %1290 = vmatmul.bf16.gmra.mxu0 %v1208
        %v1291 = vpop.f32.mrf.mxu0
        %v1292 = vadd.f32 %v1232, %v1291
        %v1293 = vpop.f32.mrf.mxu0
        %v1294 = vadd.f32 %v1232, %v1293
        %1295 = vmatmul.bf16.gmra.mxu0 %v1209
        %v1296 = vpop.f32.mrf.mxu0
        %v1297 = vadd.f32 %v1232, %v1296
        %v1298 = vpop.f32.mrf.mxu0
        %v1299 = vadd.f32 %v1232, %v1298
        %1300 = vdwg.mxu0
        %p1301 = scmp.gt.s32.totalorder %s30, 0
        %v1302 = vadd.f32 %v1292, %v441
        %v1303 = vadd.f32 %v1294, %v442
        %v1304 = vadd.f32 %v1297, %v443
        %v1305 = vadd.f32 %v1299, %v444
        %s1306 = scalar_select %p1301, 1, 0
        %v1307 = vstv %s1306
        %vm1308 = vcmp.eq.s32.totalorder %v1307, 1
        %v1309 = vsel %vm1308, %v1302, %v1292
        %v1310 = vsel %vm1308, %v1303, %v1294
        %v1311 = vsel %vm1308, %v1304, %v1297
        %v1312 = vsel %vm1308, %v1305, %v1299
        %1313 = vst [vmem:[#allocation2 + $0x8] sm:$0xff] %v1309
        %1314 = vst [vmem:[#allocation2 + $0x10] sm:$0xff] %v1310
        %1315 = vst [vmem:[#allocation2 + $0x20] sm:$0xff] %v1311
        %1316 = vst [vmem:[#allocation2 + $0x28] sm:$0xff] %v1312
        %p1317 = scmp.eq.s32.totalorder %s30, 2
        // Predicated region
        $region85: #{tpu_custom_call.1} parent=55 // pred_check
          %p1318 = pneg %p1317
        $region86: #{tpu_custom_call.1} parent=55 // pred_check_branch
          %1320 = sbr.rel (%p1318) target = $region88
        $region87: #{tpu_custom_call.1} parent=55 // pred_region
          %v1321 = vpack.c.bf16 %v1310, %v1309
          %v1322 = vpack.c.bf16 %v1312, %v1311
          %v1323 = vld [vmem:[#allocation11] sm:$0xff]
          %v1324 = vld [vmem:[#allocation11 + $0x8] sm:$0xff]
          %v1325 = vld [vmem:[#allocation11 + $0x10] sm:$0xff]
          %v1326 = vld [vmem:[#allocation11 + $0x18] sm:$0xff]
          %v1327 = vld [vmem:[#allocation11 + $0x20] sm:$0xff]
          %v1328 = vld [vmem:[#allocation11 + $0x28] sm:$0xff]
          %v1329 = vld [vmem:[#allocation11 + $0x30] sm:$0xff]
          %v1330 = vld [vmem:[#allocation11 + $0x38] sm:$0xff]
          %v1331 = vld [vmem:[#allocation11 + $0x40] sm:$0xff]
          %v1332 = vld [vmem:[#allocation11 + $0x48] sm:$0xff]
          %v1333 = vld [vmem:[#allocation11 + $0x50] sm:$0xff]
          %v1334 = vld [vmem:[#allocation11 + $0x58] sm:$0xff]
          %v1335 = vld [vmem:[#allocation11 + $0x60] sm:$0xff]
          %v1336 = vld [vmem:[#allocation11 + $0x68] sm:$0xff]
          %v1337 = vld [vmem:[#allocation11 + $0x70] sm:$0xff]
          %v1338 = vld [vmem:[#allocation11 + $0x78] sm:$0xff]
          %v1339 = vld [vmem:[%s6] sm:$0x3]
          %v1341 = vperm.slane %v1339, 0
          %v1342 = vperm.slane %v1339, 1
          %v1361 = vunpack.c.l.b16 %v1323
          %v1362 = vunpack.c.h.b16 %v1323
          %v1363 = vunpack.c.l.b16 %v1324
          %v1364 = vunpack.c.h.b16 %v1324
          %v1365 = vunpack.c.l.b16 %v1325
          %v1366 = vunpack.c.h.b16 %v1325
          %v1367 = vunpack.c.l.b16 %v1326
          %v1368 = vunpack.c.h.b16 %v1326
          %v1369 = vunpack.c.l.b16 %v1327
          %v1370 = vunpack.c.h.b16 %v1327
          %v1371 = vunpack.c.l.b16 %v1328
          %v1372 = vunpack.c.h.b16 %v1328
          %v1373 = vunpack.c.l.b16 %v1329
          %v1374 = vunpack.c.h.b16 %v1329
          %v1375 = vunpack.c.l.b16 %v1330
          %v1376 = vunpack.c.h.b16 %v1330
          %v1377 = vunpack.c.l.b16 %v1331
          %v1378 = vunpack.c.h.b16 %v1331
          %v1379 = vunpack.c.l.b16 %v1332
          %v1380 = vunpack.c.h.b16 %v1332
          %v1381 = vunpack.c.l.b16 %v1333
          %v1382 = vunpack.c.h.b16 %v1333
          %v1383 = vunpack.c.l.b16 %v1334
          %v1384 = vunpack.c.h.b16 %v1334
          %v1385 = vunpack.c.l.b16 %v1335
          %v1386 = vunpack.c.h.b16 %v1335
          %v1387 = vunpack.c.l.b16 %v1336
          %v1388 = vunpack.c.h.b16 %v1336
          %v1389 = vunpack.c.l.b16 %v1337
          %v1390 = vunpack.c.h.b16 %v1337
          %v1391 = vunpack.c.l.b16 %v1338
          %v1392 = vunpack.c.h.b16 %v1338
          %v1393 = vpack.c.b16 %v1363, %v1361
          %v1394 = vpack.c.b16 %v1364, %v1362
          %v1395 = vpack.c.b16 %v1367, %v1365
          %v1396 = vpack.c.b16 %v1368, %v1366
          %v1397 = vpack.c.b16 %v1371, %v1369
          %v1398 = vpack.c.b16 %v1372, %v1370
          %v1399 = vpack.c.b16 %v1375, %v1373
          %v1400 = vpack.c.b16 %v1376, %v1374
          %v1401 = vpack.c.b16 %v1379, %v1377
          %v1402 = vpack.c.b16 %v1380, %v1378
          %v1403 = vpack.c.b16 %v1383, %v1381
          %v1404 = vpack.c.b16 %v1384, %v1382
          %v1405 = vpack.c.b16 %v1387, %v1385
          %v1406 = vpack.c.b16 %v1388, %v1386
          %v1407 = vpack.c.b16 %v1391, %v1389
          %v1408 = vpack.c.b16 %v1392, %v1390
          %1425 = vmatpush.bf16.msra.mxu0 %v1407
          %1426 = vmatpush.bf16.msra.mxu0 %v1405
          %1427 = vmatpush.bf16.msra.mxu0 %v1403
          %1428 = vmatpush.bf16.msra.mxu0 %v1401
          %1429 = vmatpush.bf16.msra.mxu0 %v1399
          %1430 = vmatpush.bf16.msra.mxu0 %v1397
          %1431 = vmatpush.bf16.msra.mxu0 %v1395
          %1432 = vmatpush.bf16.msra.mxu0 %v1393
          %1433 = vmatmul.bf16.gmra.mxu0 %v1321
          %v1434 = vpop.f32.mrf.mxu0
          %v1435 = vadd.f32 %v1341, %v1434
          %v1436 = vpop.f32.mrf.mxu0
          %v1437 = vadd.f32 %v1341, %v1436
          %1438 = vmatmul.bf16.gmra.mxu0 %v1322
          %v1439 = vpop.f32.mrf.mxu0
          %v1440 = vadd.f32 %v1341, %v1439
          %v1441 = vpop.f32.mrf.mxu0
          %v1442 = vadd.f32 %v1341, %v1441
          %1443 = vdwg.mxu0
          %1444 = vmatpush.bf16.msra.mxu0 %v1408
          %1445 = vmatpush.bf16.msra.mxu0 %v1406
          %1446 = vmatpush.bf16.msra.mxu0 %v1404
          %1447 = vmatpush.bf16.msra.mxu0 %v1402
          %1448 = vmatpush.bf16.msra.mxu0 %v1400
          %1449 = vmatpush.bf16.msra.mxu0 %v1398
          %1450 = vmatpush.bf16.msra.mxu0 %v1396
          %1451 = vmatpush.bf16.msra.mxu0 %v1394
          %1452 = vmatmul.bf16.gmra.mxu0 %v1321
          %v1453 = vpop.f32.mrf.mxu0
          %v1454 = vadd.f32 %v1342, %v1453
          %v1455 = vpop.f32.mrf.mxu0
          %v1456 = vadd.f32 %v1342, %v1455
          %1457 = vmatmul.bf16.gmra.mxu0 %v1322
          %v1458 = vpop.f32.mrf.mxu0
          %v1459 = vadd.f32 %v1342, %v1458
          %v1460 = vpop.f32.mrf.mxu0
          %v1461 = vadd.f32 %v1342, %v1460
          %1462 = vdwg.mxu0
          %v1463 = vmax.f32 %v1435, 0.0
          %v1464 = vmax.f32 %v1454, 0.0
          %v1465 = vmax.f32 %v1437, 0.0
          %v1466 = vmax.f32 %v1456, 0.0
          %v1467 = vmax.f32 %v1440, 0.0
          %v1468 = vmax.f32 %v1459, 0.0
          %v1469 = vmax.f32 %v1442, 0.0
          %v1470 = vmax.f32 %v1461, 0.0
          %v1471 = vpack.c.bf16 %v1465, %v1463
          %v1472 = vpack.c.bf16 %v1466, %v1464
          %v1473 = vpack.c.bf16 %v1469, %v1467
          %v1474 = vpack.c.bf16 %v1470, %v1468
          %v1475 = vld [vmem:[#allocation12] sm:$0xf]
          %v1476 = vld [vmem:[#allocation12 + $0x4] sm:$0xf]
          %v1477 = vld [vmem:[#allocation12 + $0x8] sm:$0xf]
          %v1478 = vld [vmem:[#allocation12 + $0xc] sm:$0xf]
          %v1479 = vld [vmem:[#allocation12 + $0x10] sm:$0xf]
          %v1480 = vld [vmem:[#allocation12 + $0x14] sm:$0xf]
          %v1481 = vld [vmem:[#allocation12 + $0x18] sm:$0xf]
          %v1482 = vld [vmem:[#allocation12 + $0x1c] sm:$0xf]
          %v1483 = vld [vmem:[#allocation12 + $0x20] sm:$0xf]
          %v1484 = vld [vmem:[#allocation12 + $0x24] sm:$0xf]
          %v1485 = vld [vmem:[#allocation12 + $0x28] sm:$0xf]
          %v1486 = vld [vmem:[#allocation12 + $0x2c] sm:$0xf]
          %v1487 = vld [vmem:[#allocation12 + $0x30] sm:$0xf]
          %v1488 = vld [vmem:[#allocation12 + $0x34] sm:$0xf]
          %v1489 = vld [vmem:[#allocation12 + $0x38] sm:$0xf]
          %v1490 = vld [vmem:[#allocation12 + $0x3c] sm:$0xf]
          %v1491 = vld [vmem:[#allocation12 + $0x40] sm:$0xf]
          %v1492 = vld [vmem:[#allocation12 + $0x44] sm:$0xf]
          %v1493 = vld [vmem:[#allocation12 + $0x48] sm:$0xf]
          %v1494 = vld [vmem:[#allocation12 + $0x4c] sm:$0xf]
          %v1495 = vld [vmem:[#allocation12 + $0x50] sm:$0xf]
          %v1496 = vld [vmem:[#allocation12 + $0x54] sm:$0xf]
          %v1497 = vld [vmem:[#allocation12 + $0x58] sm:$0xf]
          %v1498 = vld [vmem:[#allocation12 + $0x5c] sm:$0xf]
          %v1499 = vld [vmem:[#allocation12 + $0x60] sm:$0xf]
          %v1500 = vld [vmem:[#allocation12 + $0x64] sm:$0xf]
          %v1501 = vld [vmem:[#allocation12 + $0x68] sm:$0xf]
          %v1502 = vld [vmem:[#allocation12 + $0x6c] sm:$0xf]
          %v1503 = vld [vmem:[#allocation12 + $0x70] sm:$0xf]
          %v1504 = vld [vmem:[#allocation12 + $0x74] sm:$0xf]
          %v1505 = vld [vmem:[#allocation12 + $0x78] sm:$0xf]
          %v1506 = vld [vmem:[#allocation12 + $0x7c] sm:$0xf]
          %v1507 = vld [vmem:[%s8] sm:$0x1]
          %v1509 = vperm.slane %v1507, 0
          %v1543 = vunpack.c.l.b16 %v1475
          %v1544 = vunpack.c.l.b16 %v1476
          %v1545 = vunpack.c.l.b16 %v1477
          %v1546 = vunpack.c.l.b16 %v1478
          %v1547 = vunpack.c.l.b16 %v1479
          %v1548 = vunpack.c.l.b16 %v1480
          %v1549 = vunpack.c.l.b16 %v1481
          %v1550 = vunpack.c.l.b16 %v1482
          %v1551 = vunpack.c.l.b16 %v1483
          %v1552 = vunpack.c.l.b16 %v1484
          %v1553 = vunpack.c.l.b16 %v1485
          %v1554 = vunpack.c.l.b16 %v1486
          %v1555 = vunpack.c.l.b16 %v1487
          %v1556 = vunpack.c.l.b16 %v1488
          %v1557 = vunpack.c.l.b16 %v1489
          %v1558 = vunpack.c.l.b16 %v1490
          %v1559 = vunpack.c.l.b16 %v1491
          %v1560 = vunpack.c.l.b16 %v1492
          %v1561 = vunpack.c.l.b16 %v1493
          %v1562 = vunpack.c.l.b16 %v1494
          %v1563 = vunpack.c.l.b16 %v1495
          %v1564 = vunpack.c.l.b16 %v1496
          %v1565 = vunpack.c.l.b16 %v1497
          %v1566 = vunpack.c.l.b16 %v1498
          %v1567 = vunpack.c.l.b16 %v1499
          %v1568 = vunpack.c.l.b16 %v1500
          %v1569 = vunpack.c.l.b16 %v1501
          %v1570 = vunpack.c.l.b16 %v1502
          %v1571 = vunpack.c.l.b16 %v1503
          %v1572 = vunpack.c.l.b16 %v1504
          %v1573 = vunpack.c.l.b16 %v1505
          %v1574 = vunpack.c.l.b16 %v1506
          %v1575 = vpack.c.b16 %v1544, %v1543
          %v1576 = vpack.c.b16 %v1546, %v1545
          %v1577 = vpack.c.b16 %v1548, %v1547
          %v1578 = vpack.c.b16 %v1550, %v1549
          %v1579 = vpack.c.b16 %v1552, %v1551
          %v1580 = vpack.c.b16 %v1554, %v1553
          %v1581 = vpack.c.b16 %v1556, %v1555
          %v1582 = vpack.c.b16 %v1558, %v1557
          %v1583 = vpack.c.b16 %v1560, %v1559
          %v1584 = vpack.c.b16 %v1562, %v1561
          %v1585 = vpack.c.b16 %v1564, %v1563
          %v1586 = vpack.c.b16 %v1566, %v1565
          %v1587 = vpack.c.b16 %v1568, %v1567
          %v1588 = vpack.c.b16 %v1570, %v1569
          %v1589 = vpack.c.b16 %v1572, %v1571
          %v1590 = vpack.c.b16 %v1574, %v1573
          %1607 = vmatpush.bf16.msra.mxu0 %v1582
          %1608 = vmatpush.bf16.msra.mxu0 %v1581
          %1609 = vmatpush.bf16.msra.mxu0 %v1580
          %1610 = vmatpush.bf16.msra.mxu0 %v1579
          %1611 = vmatpush.bf16.msra.mxu0 %v1578
          %1612 = vmatpush.bf16.msra.mxu0 %v1577
          %1613 = vmatpush.bf16.msra.mxu0 %v1576
          %1614 = vmatpush.bf16.msra.mxu0 %v1575
          %1615 = vmatmul.bf16.gmra.mxu0 %v1471
          %v1616 = vpop.f32.mrf.mxu0
          %v1617 = vadd.f32 %v1509, %v1616
          %v1618 = vpop.f32.mrf.mxu0
          %v1619 = vadd.f32 %v1509, %v1618
          %1620 = vmatmul.bf16.gmra.mxu0 %v1473
          %v1621 = vpop.f32.mrf.mxu0
          %v1622 = vadd.f32 %v1509, %v1621
          %v1623 = vpop.f32.mrf.mxu0
          %v1624 = vadd.f32 %v1509, %v1623
          %1625 = vdwg.mxu0
          %1626 = vmatpush.bf16.msra.mxu0 %v1590
          %1627 = vmatpush.bf16.msra.mxu0 %v1589
          %1628 = vmatpush.bf16.msra.mxu0 %v1588
          %1629 = vmatpush.bf16.msra.mxu0 %v1587
          %1630 = vmatpush.bf16.msra.mxu0 %v1586
          %1631 = vmatpush.bf16.msra.mxu0 %v1585
          %1632 = vmatpush.bf16.msra.mxu0 %v1584
          %1633 = vmatpush.bf16.msra.mxu0 %v1583
          %1634 = vmatmul.bf16.gmra.mxu0 %v1472
          %v1635 = vpop.f32.mrf.mxu0
          %v1636 = vadd.f32 %v1617, %v1635
          %v1637 = vpop.f32.mrf.mxu0
          %v1638 = vadd.f32 %v1619, %v1637
          %1639 = vmatmul.bf16.gmra.mxu0 %v1474
          %v1640 = vpop.f32.mrf.mxu0
          %v1641 = vadd.f32 %v1622, %v1640
          %v1642 = vpop.f32.mrf.mxu0
          %v1643 = vadd.f32 %v1624, %v1642
          %1644 = vdwg.mxu0
          %1645 = vst [vmem:[#allocation14] sm:$0xff] %v1636
          %1646 = vst [vmem:[#allocation14 + $0x8] sm:$0xff] %v1638
          %1647 = vst [vmem:[#allocation14 + $0x10] sm:$0xff] %v1641
          %1648 = vst [vmem:[#allocation14 + $0x18] sm:$0xff] %v1643
        $region88: #{tpu_custom_call.1} parent=55 // pred_fallthru
          _
        // Predicated region
        $region89: #{tpu_custom_call.1} parent=55 // pred_check
          %p1649 = pneg %p249
        $region90: #{tpu_custom_call.1} parent=55 // pred_check_branch
          %1651 = sbr.rel (%p1649) target = $region92
        $region91: #{tpu_custom_call.1} parent=55 // pred_region
          %s1652 = smul.u32 2, %s29
          %1654 = vsyncadd [#allocation5], 0
          %s1655 = smul.addr %s1652, 2
          %s1656 = smul.addr %s1655, 8
          %s1657 = scalar_lea.hbm %s9, %s1656
          %s1658 = sshll.u32 [#allocation14], 4
          %s1659 = int_to_ptr.vmem [resolvable:$true] %s1658
          %s1660 = sshll.u32 %s1657, 4
          %s1661 = int_to_ptr.hbm [resolvable:$true] %s1660
          %1666 = dma.vmem_to_hbm [thread:$0]  %s1659, 512, %s1661, [#allocation5], 128, 128, 8
        $region92: #{tpu_custom_call.1} parent=55 // pred_fallthru
          _
        // Predicated region
        $region93: #{tpu_custom_call.1} parent=55 // pred_check
          %p1667 = pneg %p249
        $region94: #{tpu_custom_call.1} parent=55 // pred_check_branch
          %1669 = sbr.rel (%p1667) target = $region96
        $region95: #{tpu_custom_call.1} parent=55 // pred_region
          %1671 = dma.done [#allocation5], 512
        $region96: #{tpu_custom_call.1} parent=55 // pred_fallthru
          _
      $region56: #{tpu_custom_call.1} parent=5 // pred_fallthru
        _
      %p1672 = scmp.le.s32.totalorder 2, %s20
      // Predicated region
      $region97: #{tpu_custom_call.1} parent=5 // pred_check
        %p1673 = pneg %p1672
      $region98: #{tpu_custom_call.1} parent=5 // pred_check_branch
        %1675 = sbr.rel (%p1673) target = $region100
      $region99: #{tpu_custom_call.1} parent=5 // pred_region
        %s1676 = ssub.s32 %s20, 2
      $region100: #{tpu_custom_call.1} parent=5 // pred_fallthru
        _
    $region6: #{tpu_custom_call.1} parent=1 // loop_footer
      %s24 = sadd.s32 1, %s20
    $region7: #{tpu_custom_call.1} parent=1 // loop_footer_branch
      %19 = sbr.rel target = $region3
    $region8: #{tpu_custom_call.1} parent=1 // loop_exit
      _
    %1677 = vsyncpa [#allocation4], 1
    %s1678 = scalar_lea.sflag [#allocation4], 1
    %1679 = vsyncpa %s1678, 1
    %1680 = vsyncpa [#allocation7], 1
    %1681 = vsyncpa [#allocation10], 1
    %1682 = vsyncpa [#allocation13], 1
    %1683 = vsyncpa [#allocation5], 1
    %s1684 = scalar_lea.sflag [#allocation5], 1
    %1685 = vsyncpa %s1684, 1

</llo_original>
